<compile_context>
chip_gen: v5e
topology: v5e:2x2
jax: 0.10.0
libtpu: 0.0.40
codegen_flags: <defaults>
</compile_context>

<pallas_src>
import numpy as np

import jax
import jax.numpy as jnp
from jax.experimental import pallas as pl
from jax.experimental.pallas import tpu as pltpu


# ---------------------------------------------------------------------------
# Problem configuration (synthetic stand-in for the checkpointed YOLO model)
# ---------------------------------------------------------------------------
B, CIN, H, W = 2, 3, 16, 16     # input image tensor (NCHW at the interface)
CMID = 32                       # hidden channels of the Conv+SiLU block
NC = 4                          # number of classes
NA = 3                          # anchors per location
NO = NC + 5                     # outputs per anchor (xywh + obj + classes)
NOUT = NA * NO                  # Detect-head channels (27)
NOUT_PAD = 128                  # lane-dense output slab width (unmasked vst)
KPAD = 32                       # im2col K (9*CIN + 1 bias col = 28) padded up
STRIDE = 8.0                    # synthetic detection stride
M = B * H * W                   # rows of the im2col / prediction matrices
ROW_TILE = 256                  # rows per grid step (one image per block here)


def _stable_sigmoid(x):
    """Numerically-stable logistic; exp and reciprocal both go to the EUP."""
    z = jnp.exp(-jnp.abs(x))                       # z in (0, 1], never overflows
    p = pl.reciprocal(1.0 + z, approx=True)        # 1/(1+z) on the EUP
    return jnp.where(x >= 0.0, p, 1.0 - p)


# ---------------------------------------------------------------------------
# Fused Pallas kernel: Conv(3x3)+SiLU -> Detect 1x1 conv + sigmoid -> decode
# ---------------------------------------------------------------------------
def _fused_autoshape_kernel(patch_ref, w1_ref, w2_ref, b2_ref,
                            gx_ref, gy_ref, dec_ref, o_ref):
    # Conv(3x3, s1, p1) + SiLU as an im2col matmul.  The 1/255 normalization
    # and the conv bias are folded into w1 / the constant-1 im2col column,
    # so the first stage is a single MXU matmul.
    h1 = jnp.dot(patch_ref[...], w1_ref[...],
                 preferred_element_type=jnp.float32)
    feat = h1 * _stable_sigmoid(h1)                          # SiLU, stays in VMEM

    # Detect head: 1x1 conv (matmul) + sigmoid; N padded to 128 lanes.
    logits = jnp.dot(feat, w2_ref[...],
                     preferred_element_type=jnp.float32) + b2_ref[...]
    s = _stable_sigmoid(logits)                              # (TM, NOUT_PAD)

    # YOLO export-mode decode as per-column affine coefficients:
    #   out = a*s + b*s^2 + cx*gx + cy*gy + d
    # xy cols: a=2*stride, cx|cy=stride, d=-stride/2 ; wh cols: b=4*anchor ;
    # obj/class cols: a=1 ; padded cols: all-zero coefficients (clean slab).
    dec = dec_ref[...]                                       # (8, NOUT_PAD)
    a, bq = dec[0:1, :], dec[1:2, :]
    cx, cy, d = dec[2:3, :], dec[3:4, :], dec[4:5, :]
    gx, gy = gx_ref[...], gy_ref[...]                        # (TM, 1)
    o_ref[...] = a * s + bq * (s * s) + cx * gx + cy * gy + d


def fused_forward(patches, w1, w2, b2, gx, gy, dec):
    """Row-tiled fused pallas_call; weights stay VMEM-resident across steps."""
    m = patches.shape[0]
    tm = min(m, ROW_TILE)
    assert m % tm == 0, "row count must tile evenly"
    return pl.pallas_call(
        _fused_autoshape_kernel,
        out_shape=jax.ShapeDtypeStruct((m, NOUT_PAD), jnp.float32),
        grid_spec=pltpu.PrefetchScalarGridSpec(
            num_scalar_prefetch=0,
            grid=(m // tm,),
            in_specs=[
                pl.BlockSpec((tm, KPAD), lambda i: (i, 0)),        # patches
                pl.BlockSpec((KPAD, CMID), lambda i: (0, 0)),      # w1 (resident)
                pl.BlockSpec((CMID, NOUT_PAD), lambda i: (0, 0)),  # w2 (resident)
                pl.BlockSpec((1, NOUT_PAD), lambda i: (0, 0)),     # b2 (resident)
                pl.BlockSpec((tm, 1), lambda i: (i, 0)),           # gx
                pl.BlockSpec((tm, 1), lambda i: (i, 0)),           # gy
                pl.BlockSpec((8, NOUT_PAD), lambda i: (0, 0)),     # decode table
            ],
            out_specs=pl.BlockSpec((tm, NOUT_PAD), lambda i: (i, 0)),
        ),
        compiler_params=pltpu.CompilerParams(
            dimension_semantics=("parallel",)),
    )(patches, w1, w2, b2, gx, gy, dec)


# ---------------------------------------------------------------------------
# Glue: im2col for a 3x3 / stride-1 / pad-1 convolution (NHWC)
# ---------------------------------------------------------------------------
def im2col_3x3(x):
    b, h, w, c = x.shape
    xp = jnp.pad(x, ((0, 0), (1, 1), (1, 1), (0, 0)))
    patches = [xp[:, dy:dy + h, dx:dx + w, :]
               for dy in range(3) for dx in range(3)]
    p = jnp.concatenate(patches, axis=-1)                    # (B, H, W, 9*C)
    return p.reshape(b * h * w, 9 * c)


# ---------------------------------------------------------------------------
# Synthetic AutoShape model parameters (deterministic), pre-folded for the
# fused kernel: 1/255 scaling, conv bias row, K/N padding, decode table, grid.
# ---------------------------------------------------------------------------
def make_params():
    k = jax.random.PRNGKey(0)
    k1, k2, k3, k4, k5 = jax.random.split(k, 5)

    # Conv(3x3) weights laid out as (9*CIN, CMID) for the im2col matmul.
    w1 = jax.random.normal(k1, (9 * CIN, CMID), jnp.float32) * 0.05
    b1 = jax.random.normal(k2, (1, CMID), jnp.float32) * 0.01
    # Fold the x/255 image normalization into the (linear) conv weights, stack
    # the bias as an extra row (matching the constant-1 im2col column), and
    # pad K up to KPAD so the matmul operand is tile-friendly.
    w1 = w1 * (1.0 / 255.0)
    w1 = jnp.concatenate([w1, b1], axis=0)                   # (9*CIN+1, CMID)
    w1 = jnp.pad(w1, ((0, KPAD - (9 * CIN + 1)), (0, 0)))

    # Detect head 1x1 conv: (CMID, NA*NO), padded to a lane-dense 128 columns.
    # Channel order matches torch Detect: c = anchor*NO + output (consistent
    # with the decode-coefficient table built below).
    w2 = jax.random.normal(k3, (CMID, NOUT), jnp.float32) * 0.05
    b2 = jax.random.normal(k4, (1, NOUT), jnp.float32) * 0.01
    w2 = jnp.pad(w2, ((0, 0), (0, NOUT_PAD - NOUT)))
    b2 = jnp.pad(b2, ((0, 0), (0, NOUT_PAD - NOUT)))

    # Anchors (NA, 2), positive.
    anchors = jnp.abs(jax.random.normal(k5, (NA, 2), jnp.float32)) * 4.0 + 4.0
    anc = np.asarray(anchors)

    # Per-column decode coefficients; rows: [a, b, cx, cy, d, pad, pad, pad].
    dec = np.zeros((8, NOUT_PAD), np.float32)
    for ai in range(NA):
        c0 = ai * NO
        dec[0, c0 + 0] = 2.0 * STRIDE               # x: 2*stride*s
        dec[2, c0 + 0] = STRIDE                     #    + stride*gx
        dec[4, c0 + 0] = -0.5 * STRIDE              #    - stride/2
        dec[0, c0 + 1] = 2.0 * STRIDE               # y: 2*stride*s
        dec[3, c0 + 1] = STRIDE                     #    + stride*gy
        dec[4, c0 + 1] = -0.5 * STRIDE              #    - stride/2
        dec[1, c0 + 2] = 4.0 * anc[ai, 0]           # w: 4*anchor_w*s^2
        dec[1, c0 + 3] = 4.0 * anc[ai, 1]           # h: 4*anchor_h*s^2
        dec[0, c0 + 4:c0 + NO] = 1.0                # obj + classes: passthrough

    # Per-row grid coordinates (rows ordered b, y, x like the im2col matrix).
    idx = np.arange(M)
    gx = (idx % W).astype(np.float32).reshape(M, 1)
    gy = ((idx // W) % H).astype(np.float32).reshape(M, 1)

    return dict(w1=w1, w2=w2, b2=b2,
                dec=jnp.asarray(dec), gx=jnp.asarray(gx), gy=jnp.asarray(gy))


@jax.jit
def autoshape_forward(im_nchw, params):
    """AutoShape tensor path: model(ims) -> export-mode Detect predictions."""
    b, c, h, w = im_nchw.shape
    x = jnp.transpose(im_nchw, (0, 2, 3, 1))                 # NCHW -> NHWC
    patches = im2col_3x3(x)                                  # (B*H*W, 9*CIN)
    ones = jnp.ones((patches.shape[0], 1), patches.dtype)    # conv-bias column
    patches = jnp.concatenate([patches, ones], axis=-1)
    patches = jnp.pad(patches, ((0, 0), (0, KPAD - patches.shape[1])))

    pred = fused_forward(patches, params["w1"], params["w2"], params["b2"],
                         params["gx"], params["gy"], params["dec"])

    # Un-pad the lane-dense slab and match torch Detect export layout:
    # (B*H*W, NA*NO) -> (B, H, W, NA, NO) -> (B, NA, H, W, NO) -> (B, NA*H*W, NO)
    y = pred[:, :NOUT].reshape(b, h, w, NA, NO)
    y = jnp.transpose(y, (0, 3, 1, 2, 4))
    return y.reshape(b, NA * h * w, NO)


if __name__ == "__main__":
    params = make_params()
    key = jax.random.PRNGKey(0)
    # Deterministic example "image batch" in [0, 255], NCHW like PyTorch.
    im = jax.random.uniform(key, (B, CIN, H, W), jnp.float32, 0.0, 255.0)

    out = autoshape_forward(im, params)
    jax.block_until_ready(out)
    assert out.shape == (B, NA * H * W, NO)
    assert bool(jnp.isfinite(out).all())
    print("KERNEL_OK")
</pallas_src>

<mosaic_0001>
module attributes {stable_mosaic.version = 11 : i64} {
  func.func @_fused_autoshape_kernel(%arg0: i32, %arg1: memref<256x32xf32, #tpu.memory_space<vmem>>, %arg2: memref<32x32xf32, #tpu.memory_space<vmem>>, %arg3: memref<32x128xf32, #tpu.memory_space<vmem>>, %arg4: memref<1x128xf32, #tpu.memory_space<vmem>>, %arg5: memref<256x1xf32, #tpu.memory_space<vmem>>, %arg6: memref<256x1xf32, #tpu.memory_space<vmem>>, %arg7: memref<8x128xf32, #tpu.memory_space<vmem>>, %arg8: memref<256x128xf32, #tpu.memory_space<vmem>>) attributes {dimension_semantics = [#tpu.dimension_semantics<parallel>], iteration_bounds = array<i64: 2>, scalar_prefetch = 0 : i64, scratch_operands = 0 : i64, tpu.core_type = #tpu.core_type<tc>, window_params = [{transform_indices = @transform_0, window_bounds = array<i64: 256, 32>}, {pipeline_mode = #tpu.pipeline_mode<synchronous>, transform_indices = @transform_1, window_bounds = array<i64: 32, 32>}, {pipeline_mode = #tpu.pipeline_mode<synchronous>, transform_indices = @transform_2, window_bounds = array<i64: 32, 128>}, {pipeline_mode = #tpu.pipeline_mode<synchronous>, transform_indices = @transform_3, window_bounds = array<i64: 1, 128>}, {transform_indices = @transform_4, window_bounds = array<i64: 256, 1>}, {transform_indices = @transform_5, window_bounds = array<i64: 256, 1>}, {pipeline_mode = #tpu.pipeline_mode<synchronous>, transform_indices = @transform_6, window_bounds = array<i64: 8, 128>}, {transform_indices = @transform_7, window_bounds = array<i64: 256, 128>}]} {
    %c0 = arith.constant 0 : index
    %c0_0 = arith.constant 0 : index
    %0 = vector.load %arg1[%c0, %c0_0] : memref<256x32xf32, #tpu.memory_space<vmem>>, vector<256x32xf32>
    %c0_1 = arith.constant 0 : index
    %c0_2 = arith.constant 0 : index
    %1 = vector.load %arg2[%c0_1, %c0_2] : memref<32x32xf32, #tpu.memory_space<vmem>>, vector<32x32xf32>
    %cst = arith.constant dense<0.000000e+00> : vector<256x32xf32>
    %2 = tpu.matmul %0, %1, %cst {dimension_numbers = #tpu.dot_dimension_numbers<[1], [0], [0], [1], [0, 0, 1, 1], [], []>} : vector<256x32xf32>, vector<32x32xf32>, vector<256x32xf32> -> vector<256x32xf32>
    %3 = math.absf %2 : vector<256x32xf32>
    %cst_3 = arith.constant 0.000000e+00 : f32
    %4 = vector.broadcast %cst_3 : f32 to vector<256x32xf32>
    %5 = arith.subf %4, %3 : vector<256x32xf32>
    %6 = math.exp %5 : vector<256x32xf32>
    %cst_4 = arith.constant 1.000000e+00 : f32
    %7 = vector.broadcast %cst_4 : f32 to vector<256x32xf32>
    %8 = arith.addf %7, %6 : vector<256x32xf32>
    %9 = tpu.reciprocal %8 {approx = true} : vector<256x32xf32> -> vector<256x32xf32>
    %cst_5 = arith.constant 0.000000e+00 : f32
    %10 = vector.broadcast %cst_5 : f32 to vector<256x32xf32>
    %11 = arith.cmpf oge, %2, %10 : vector<256x32xf32>
    %cst_6 = arith.constant 1.000000e+00 : f32
    %12 = vector.broadcast %cst_6 : f32 to vector<256x32xf32>
    %13 = arith.subf %12, %9 : vector<256x32xf32>
    %14 = arith.select %11, %9, %13 : vector<256x32xi1>, vector<256x32xf32>
    %15 = arith.mulf %2, %14 : vector<256x32xf32>
    %c0_7 = arith.constant 0 : index
    %c0_8 = arith.constant 0 : index
    %16 = vector.load %arg3[%c0_7, %c0_8] : memref<32x128xf32, #tpu.memory_space<vmem>>, vector<32x128xf32>
    %cst_9 = arith.constant dense<0.000000e+00> : vector<256x128xf32>
    %17 = tpu.matmul %15, %16, %cst_9 {dimension_numbers = #tpu.dot_dimension_numbers<[1], [0], [0], [1], [0, 0, 1, 1], [], []>} : vector<256x32xf32>, vector<32x128xf32>, vector<256x128xf32> -> vector<256x128xf32>
    %c0_10 = arith.constant 0 : index
    %c0_11 = arith.constant 0 : index
    %18 = vector.load %arg4[%c0_10, %c0_11] : memref<1x128xf32, #tpu.memory_space<vmem>>, vector<1x128xf32>
    %19 = vector.broadcast %18 : vector<1x128xf32> to vector<256x128xf32>
    %20 = arith.addf %17, %19 : vector<256x128xf32>
    %21 = math.absf %20 : vector<256x128xf32>
    %cst_12 = arith.constant 0.000000e+00 : f32
    %22 = vector.broadcast %cst_12 : f32 to vector<256x128xf32>
    %23 = arith.subf %22, %21 : vector<256x128xf32>
    %24 = math.exp %23 : vector<256x128xf32>
    %cst_13 = arith.constant 1.000000e+00 : f32
    %25 = vector.broadcast %cst_13 : f32 to vector<256x128xf32>
    %26 = arith.addf %25, %24 : vector<256x128xf32>
    %27 = tpu.reciprocal %26 {approx = true} : vector<256x128xf32> -> vector<256x128xf32>
    %cst_14 = arith.constant 0.000000e+00 : f32
    %28 = vector.broadcast %cst_14 : f32 to vector<256x128xf32>
    %29 = arith.cmpf oge, %20, %28 : vector<256x128xf32>
    %cst_15 = arith.constant 1.000000e+00 : f32
    %30 = vector.broadcast %cst_15 : f32 to vector<256x128xf32>
    %31 = arith.subf %30, %27 : vector<256x128xf32>
    %32 = arith.select %29, %27, %31 : vector<256x128xi1>, vector<256x128xf32>
    %c0_16 = arith.constant 0 : index
    %c0_17 = arith.constant 0 : index
    %33 = vector.load %arg7[%c0_16, %c0_17] : memref<8x128xf32, #tpu.memory_space<vmem>>, vector<8x128xf32>
    %34 = vector.extract_strided_slice %33 {offsets = [0, 0], sizes = [1, 128], strides = [1, 1]} : vector<8x128xf32> to vector<1x128xf32>
    %35 = vector.extract_strided_slice %33 {offsets = [1, 0], sizes = [1, 128], strides = [1, 1]} : vector<8x128xf32> to vector<1x128xf32>
    %36 = vector.extract_strided_slice %33 {offsets = [2, 0], sizes = [1, 128], strides = [1, 1]} : vector<8x128xf32> to vector<1x128xf32>
    %37 = vector.extract_strided_slice %33 {offsets = [3, 0], sizes = [1, 128], strides = [1, 1]} : vector<8x128xf32> to vector<1x128xf32>
    %38 = vector.extract_strided_slice %33 {offsets = [4, 0], sizes = [1, 128], strides = [1, 1]} : vector<8x128xf32> to vector<1x128xf32>
    %c0_18 = arith.constant 0 : index
    %c0_19 = arith.constant 0 : index
    %39 = vector.load %arg5[%c0_18, %c0_19] : memref<256x1xf32, #tpu.memory_space<vmem>>, vector<256x1xf32>
    %c0_20 = arith.constant 0 : index
    %c0_21 = arith.constant 0 : index
    %40 = vector.load %arg6[%c0_20, %c0_21] : memref<256x1xf32, #tpu.memory_space<vmem>>, vector<256x1xf32>
    %41 = vector.broadcast %34 : vector<1x128xf32> to vector<256x128xf32>
    %42 = arith.mulf %41, %32 : vector<256x128xf32>
    %43 = arith.mulf %32, %32 : vector<256x128xf32>
    %44 = vector.broadcast %35 : vector<1x128xf32> to vector<256x128xf32>
    %45 = arith.mulf %44, %43 : vector<256x128xf32>
    %46 = arith.addf %42, %45 : vector<256x128xf32>
    %47 = vector.broadcast %36 : vector<1x128xf32> to vector<256x128xf32>
    %48 = vector.broadcast %39 : vector<256x1xf32> to vector<256x128xf32>
    %49 = arith.mulf %47, %48 : vector<256x128xf32>
    %50 = arith.addf %46, %49 : vector<256x128xf32>
    %51 = vector.broadcast %37 : vector<1x128xf32> to vector<256x128xf32>
    %52 = vector.broadcast %40 : vector<256x1xf32> to vector<256x128xf32>
    %53 = arith.mulf %51, %52 : vector<256x128xf32>
    %54 = arith.addf %50, %53 : vector<256x128xf32>
    %55 = vector.broadcast %38 : vector<1x128xf32> to vector<256x128xf32>
    %56 = arith.addf %54, %55 : vector<256x128xf32>
    %c0_22 = arith.constant 0 : index
    %c0_23 = arith.constant 0 : index
    %57 = vector.load %arg8[%c0_22, %c0_23] : memref<256x128xf32, #tpu.memory_space<vmem>>, vector<256x128xf32>
    tpu.vector_store %arg8[%c0_22, %c0_23], %56 {strides = array<i32>} : memref<256x128xf32, #tpu.memory_space<vmem>>, vector<256x128xf32>,
    return
  }
  func.func @transform_0(%arg0: i32) -> (i32, i32) {
    %c0_i32 = arith.constant 0 : i32
    %c0_i32_0 = arith.constant 0 : i32
    return %arg0, %c0_i32 : i32, i32
  }
  func.func @transform_1(%arg0: i32) -> (i32, i32) {
    %c0_i32 = arith.constant 0 : i32
    %c0_i32_0 = arith.constant 0 : i32
    %c0_i32_1 = arith.constant 0 : i32
    return %c0_i32, %c0_i32_0 : i32, i32
  }
  func.func @transform_2(%arg0: i32) -> (i32, i32) {
    %c0_i32 = arith.constant 0 : i32
    %c0_i32_0 = arith.constant 0 : i32
    %c0_i32_1 = arith.constant 0 : i32
    return %c0_i32, %c0_i32_0 : i32, i32
  }
  func.func @transform_3(%arg0: i32) -> (i32, i32) {
    %c0_i32 = arith.constant 0 : i32
    %c0_i32_0 = arith.constant 0 : i32
    %c0_i32_1 = arith.constant 0 : i32
    return %c0_i32, %c0_i32_0 : i32, i32
  }
  func.func @transform_4(%arg0: i32) -> (i32, i32) {
    %c0_i32 = arith.constant 0 : i32
    %c0_i32_0 = arith.constant 0 : i32
    return %arg0, %c0_i32 : i32, i32
  }
  func.func @transform_5(%arg0: i32) -> (i32, i32) {
    %c0_i32 = arith.constant 0 : i32
    %c0_i32_0 = arith.constant 0 : i32
    return %arg0, %c0_i32 : i32, i32
  }
  func.func @transform_6(%arg0: i32) -> (i32, i32) {
    %c0_i32 = arith.constant 0 : i32
    %c0_i32_0 = arith.constant 0 : i32
    %c0_i32_1 = arith.constant 0 : i32
    return %c0_i32, %c0_i32_0 : i32, i32
  }
  func.func @transform_7(%arg0: i32) -> (i32, i32) {
    %c0_i32 = arith.constant 0 : i32
    %c0_i32_0 = arith.constant 0 : i32
    return %arg0, %c0_i32 : i32, i32
  }
}

</mosaic_0001>

<llo_original>
// kernel: autoshape_forward.1
$region0: #{autoshape_forward.1}
  #allocation0 [shape = 'u32[]', space=smem, size = 0x4, offset = 0x4, fixed_abs, tag = 'smem constant byte address 0x4 - core index']
  #allocation1 [shape = 'u32[72,128]{1,0:T(1,128)}', space=vmem, size = 0x9000, scoped, tag = 'internal scratch']
  %s0 = inlined_call_operand.vmem [shape: f32[512,32], index: 0, kind: input, shape index: {}]
  %s1 = inlined_call_operand.vmem [shape: f32[32,32], index: 1, kind: input, shape index: {}]
  %s2 = inlined_call_operand.vmem [shape: f32[32,128], index: 2, kind: input, shape index: {}]
  %s3 = inlined_call_operand.vmem [shape: f32[1,128], index: 3, kind: input, shape index: {}]
  %s4 = inlined_call_operand.vmem [shape: f32[512,1], index: 4, kind: input, shape index: {}]
  %s5 = inlined_call_operand.vmem [shape: f32[512,1], index: 5, kind: input, shape index: {}]
  %s6 = inlined_call_operand.vmem [shape: f32[8,128], index: 6, kind: input, shape index: {}]
  %s7 = inlined_call_operand.vmem [shape: f32[512,128], index: 7, kind: output, shape index: {}]
  %s8 = sld [smem:[#allocation0]]
  $region61: #{autoshape_forward.1} parent=0
    _
  %s10 = ssub.s32 1, %s8
  %s11 = scalar_select 0, %s10, %s8
  loop: start=0, step=1, limit=4
  $region2: #{autoshape_forward.1} parent=0 // loop_pre_header
    _
  $region3: #{autoshape_forward.1} parent=0 // loop_header
    %s13 = sphi 0, %s17
    %p14 = scmp.ge.s32.totalorder %s13, 4
    %s23 = sphi 0, %s25
    %s26 = sphi 0, %s23
    %s27 = sphi 0, %s26
    %s43 = sphi 0, %s27
    %s47 = sphi 0, %s47
    %s49 = sphi 0, %s47
    %s50 = sphi 0, %s49
    %s64 = sphi 0, %s50
    %s68 = sphi 0, %s68
    %s70 = sphi 0, %s68
    %s71 = sphi 0, %s70
    %s85 = sphi 0, %s71
    %s89 = sphi 0, %s89
    %s91 = sphi 0, %s89
    %s92 = sphi 0, %s91
    %s106 = sphi 0, %s92
    %s112 = sphi 0, %s114
    %s115 = sphi 0, %s112
    %s116 = sphi 0, %s115
    %s132 = sphi 0, %s116
    %s138 = sphi 0, %s140
    %s141 = sphi 0, %s138
    %s142 = sphi 0, %s141
    %s158 = sphi 0, %s142
    %s162 = sphi 0, %s162
    %s164 = sphi 0, %s162
    %s165 = sphi 0, %s164
    %s179 = sphi 0, %s165
    %s185 = sphi 0, %s187
    %s188 = sphi 0, %s185
    %s189 = sphi 0, %s188
    %s205 = sphi 0, %s189
  $region4: #{autoshape_forward.1} parent=0 // loop_header_branch
    %16 = sbr.rel (%p14) target = $region8
  $region5: #{autoshape_forward.1} parent=0 // loop_body
    %s18 = ssub.s32 %s13, 1
    %s19 = ssub.s32 %s13, 2
    %s20 = sadd.s32 %s13, 1
    %s21 = ssub.s32 %s13, %s20
    %p22 = scmp.eq.s32.totalorder %s21, 0
    %s24 = sadd.s32 %s23, 1
    %s25 = scalar_select %p22, %s23, %s24
    %p28 = pneg %p22
    %p29 = scmp.eq.s32.totalorder %s13, 1
    %p30 = por %p28, %p29
    %p31 = scmp.ne.s32.totalorder %s23, %s26
    %p32 = scmp.eq.s32.totalorder %s13, 0
    %p33 = por %p31, %p32
    %p34 = scmp.ne.s32.totalorder %s23, %s26
    %p35 = scmp.eq.s32.totalorder %s18, 1
    %p36 = por %p34, %p35
    %p37 = scmp.ne.s32.totalorder %s26, %s27
    %p38 = scmp.eq.s32.totalorder %s18, 0
    %p39 = por %p37, %p38
    %p40 = scmp.ne.s32.totalorder %s26, %s27
    %p41 = scmp.eq.s32.totalorder %s19, 1
    %p42 = por %p40, %p41
    %p44 = scmp.ne.s32.totalorder %s27, %s43
    %p45 = scmp.eq.s32.totalorder %s19, 0
    %p46 = por %p44, %p45
    %s48 = sadd.s32 %s47, 1
    %p51 = scmp.eq.s32.totalorder %s13, 1
    %p52 = scmp.ne.s32.totalorder %s47, %s49
    %p53 = scmp.eq.s32.totalorder %s13, 0
    %p54 = por %p52, %p53
    %p55 = scmp.ne.s32.totalorder %s47, %s49
    %p56 = scmp.eq.s32.totalorder %s18, 1
    %p57 = por %p55, %p56
    %p58 = scmp.ne.s32.totalorder %s49, %s50
    %p59 = scmp.eq.s32.totalorder %s18, 0
    %p60 = por %p58, %p59
    %p61 = scmp.ne.s32.totalorder %s49, %s50
    %p62 = scmp.eq.s32.totalorder %s19, 1
    %p63 = por %p61, %p62
    %p65 = scmp.ne.s32.totalorder %s50, %s64
    %p66 = scmp.eq.s32.totalorder %s19, 0
    %p67 = por %p65, %p66
    %s69 = sadd.s32 %s68, 1
    %p72 = scmp.eq.s32.totalorder %s13, 1
    %p73 = scmp.ne.s32.totalorder %s68, %s70
    %p74 = scmp.eq.s32.totalorder %s13, 0
    %p75 = por %p73, %p74
    %p76 = scmp.ne.s32.totalorder %s68, %s70
    %p77 = scmp.eq.s32.totalorder %s18, 1
    %p78 = por %p76, %p77
    %p79 = scmp.ne.s32.totalorder %s70, %s71
    %p80 = scmp.eq.s32.totalorder %s18, 0
    %p81 = por %p79, %p80
    %p82 = scmp.ne.s32.totalorder %s70, %s71
    %p83 = scmp.eq.s32.totalorder %s19, 1
    %p84 = por %p82, %p83
    %p86 = scmp.ne.s32.totalorder %s71, %s85
    %p87 = scmp.eq.s32.totalorder %s19, 0
    %p88 = por %p86, %p87
    %s90 = sadd.s32 %s89, 1
    %p93 = scmp.eq.s32.totalorder %s13, 1
    %p94 = scmp.ne.s32.totalorder %s89, %s91
    %p95 = scmp.eq.s32.totalorder %s13, 0
    %p96 = por %p94, %p95
    %p97 = scmp.ne.s32.totalorder %s89, %s91
    %p98 = scmp.eq.s32.totalorder %s18, 1
    %p99 = por %p97, %p98
    %p100 = scmp.ne.s32.totalorder %s91, %s92
    %p101 = scmp.eq.s32.totalorder %s18, 0
    %p102 = por %p100, %p101
    %p103 = scmp.ne.s32.totalorder %s91, %s92
    %p104 = scmp.eq.s32.totalorder %s19, 1
    %p105 = por %p103, %p104
    %p107 = scmp.ne.s32.totalorder %s92, %s106
    %p108 = scmp.eq.s32.totalorder %s19, 0
    %p109 = por %p107, %p108
    %s110 = ssub.s32 %s13, %s20
    %p111 = scmp.eq.s32.totalorder %s110, 0
    %s113 = sadd.s32 %s112, 1
    %s114 = scalar_select %p111, %s112, %s113
    %p117 = pneg %p111
    %p118 = scmp.eq.s32.totalorder %s13, 1
    %p119 = por %p117, %p118
    %p120 = scmp.ne.s32.totalorder %s112, %s115
    %p121 = scmp.eq.s32.totalorder %s13, 0
    %p122 = por %p120, %p121
    %p123 = scmp.ne.s32.totalorder %s112, %s115
    %p124 = scmp.eq.s32.totalorder %s18, 1
    %p125 = por %p123, %p124
    %p126 = scmp.ne.s32.totalorder %s115, %s116
    %p127 = scmp.eq.s32.totalorder %s18, 0
    %p128 = por %p126, %p127
    %p129 = scmp.ne.s32.totalorder %s115, %s116
    %p130 = scmp.eq.s32.totalorder %s19, 1
    %p131 = por %p129, %p130
    %p133 = scmp.ne.s32.totalorder %s116, %s132
    %p134 = scmp.eq.s32.totalorder %s19, 0
    %p135 = por %p133, %p134
    %s136 = ssub.s32 %s13, %s20
    %p137 = scmp.eq.s32.totalorder %s136, 0
    %s139 = sadd.s32 %s138, 1
    %s140 = scalar_select %p137, %s138, %s139
    %p143 = pneg %p137
    %p144 = scmp.eq.s32.totalorder %s13, 1
    %p145 = por %p143, %p144
    %p146 = scmp.ne.s32.totalorder %s138, %s141
    %p147 = scmp.eq.s32.totalorder %s13, 0
    %p148 = por %p146, %p147
    %p149 = scmp.ne.s32.totalorder %s138, %s141
    %p150 = scmp.eq.s32.totalorder %s18, 1
    %p151 = por %p149, %p150
    %p152 = scmp.ne.s32.totalorder %s141, %s142
    %p153 = scmp.eq.s32.totalorder %s18, 0
    %p154 = por %p152, %p153
    %p155 = scmp.ne.s32.totalorder %s141, %s142
    %p156 = scmp.eq.s32.totalorder %s19, 1
    %p157 = por %p155, %p156
    %p159 = scmp.ne.s32.totalorder %s142, %s158
    %p160 = scmp.eq.s32.totalorder %s19, 0
    %p161 = por %p159, %p160
    %s163 = sadd.s32 %s162, 1
    %p166 = scmp.eq.s32.totalorder %s13, 1
    %p167 = scmp.ne.s32.totalorder %s162, %s164
    %p168 = scmp.eq.s32.totalorder %s13, 0
    %p169 = por %p167, %p168
    %p170 = scmp.ne.s32.totalorder %s162, %s164
    %p171 = scmp.eq.s32.totalorder %s18, 1
    %p172 = por %p170, %p171
    %p173 = scmp.ne.s32.totalorder %s164, %s165
    %p174 = scmp.eq.s32.totalorder %s18, 0
    %p175 = por %p173, %p174
    %p176 = scmp.ne.s32.totalorder %s164, %s165
    %p177 = scmp.eq.s32.totalorder %s19, 1
    %p178 = por %p176, %p177
    %p180 = scmp.ne.s32.totalorder %s165, %s179
    %p181 = scmp.eq.s32.totalorder %s19, 0
    %p182 = por %p180, %p181
    %s183 = ssub.s32 %s13, %s20
    %p184 = scmp.eq.s32.totalorder %s183, 0
    %s186 = sadd.s32 %s185, 1
    %s187 = scalar_select %p184, %s185, %s186
    %p190 = pneg %p184
    %p191 = scmp.eq.s32.totalorder %s13, 1
    %p192 = por %p190, %p191
    %p193 = scmp.ne.s32.totalorder %s185, %s188
    %p194 = scmp.eq.s32.totalorder %s13, 0
    %p195 = por %p193, %p194
    %p196 = scmp.ne.s32.totalorder %s185, %s188
    %p197 = scmp.eq.s32.totalorder %s18, 1
    %p198 = por %p196, %p197
    %p199 = scmp.ne.s32.totalorder %s188, %s189
    %p200 = scmp.eq.s32.totalorder %s18, 0
    %p201 = por %p199, %p200
    %p202 = scmp.ne.s32.totalorder %s188, %s189
    %p203 = scmp.eq.s32.totalorder %s19, 1
    %p204 = por %p202, %p203
    %p206 = scmp.ne.s32.totalorder %s189, %s205
    %p207 = scmp.eq.s32.totalorder %s19, 0
    %p208 = por %p206, %p207
    %p209 = scmp.le.s32.totalorder 1, %s13
    %p210 = scmp.lt.s32.totalorder %s13, 3
    %p211 = pnand %p209, %p210
    %p212 = pneg %p211
    // Predicated region
    $region9: #{autoshape_forward.1} parent=5 // pred_check
      _
    $region10: #{autoshape_forward.1} parent=5 // pred_check_branch
      %214 = sbr.rel (%p211) target = $region12
    $region11: #{autoshape_forward.1} parent=5 // pred_region
      %s215 = ssub.s32 %s13, 1
      // Predicated region
      $region13: #{autoshape_forward.1} parent=11 // pred_check
        %p216 = pneg %p60
      $region14: #{autoshape_forward.1} parent=11 // pred_check_branch
        %218 = sbr.rel (%p216) target = $region16
      $region15: #{autoshape_forward.1} parent=11 // pred_region
        _
      $region16: #{autoshape_forward.1} parent=11 // pred_fallthru
        _
      // Predicated region
      $region17: #{autoshape_forward.1} parent=11 // pred_check
        %p219 = pneg %p81
      $region18: #{autoshape_forward.1} parent=11 // pred_check_branch
        %221 = sbr.rel (%p219) target = $region20
      $region19: #{autoshape_forward.1} parent=11 // pred_region
        _
      $region20: #{autoshape_forward.1} parent=11 // pred_fallthru
        _
      // Predicated region
      $region21: #{autoshape_forward.1} parent=11 // pred_check
        %p222 = pneg %p102
      $region22: #{autoshape_forward.1} parent=11 // pred_check_branch
        %224 = sbr.rel (%p222) target = $region24
      $region23: #{autoshape_forward.1} parent=11 // pred_region
        _
      $region24: #{autoshape_forward.1} parent=11 // pred_fallthru
        _
      // Predicated region
      $region25: #{autoshape_forward.1} parent=11 // pred_check
        %p225 = pneg %p175
      $region26: #{autoshape_forward.1} parent=11 // pred_check_branch
        %227 = sbr.rel (%p225) target = $region28
      $region27: #{autoshape_forward.1} parent=11 // pred_region
        _
      $region28: #{autoshape_forward.1} parent=11 // pred_fallthru
        _
    $region12: #{autoshape_forward.1} parent=5 // pred_fallthru
      _
    %p228 = scmp.lt.s32.totalorder %s13, 2
    // Predicated region
    $region29: #{autoshape_forward.1} parent=5 // pred_check
      %p229 = pneg %p228
    $region30: #{autoshape_forward.1} parent=5 // pred_check_branch
      %231 = sbr.rel (%p229) target = $region32
    $region31: #{autoshape_forward.1} parent=5 // pred_region
      // Predicated region
      $region33: #{autoshape_forward.1} parent=31 // pred_check
        %p232 = pneg %p33
      $region34: #{autoshape_forward.1} parent=31 // pred_check_branch
        %234 = sbr.rel (%p232) target = $region36
      $region35: #{autoshape_forward.1} parent=31 // pred_region
        %s235 = smul.u32 32, %s13
        %p236 = scmp.lt.s32.totalorder %s235, 63
        %s237 = scalar_select %p236, %s235, 63
        %s238 = smul.addr %s237, 8
        %s239 = scalar_lea.vmem %s0, %s238
        %s240 = smul.u32 32, %s13
      $region36: #{autoshape_forward.1} parent=31 // pred_fallthru
        _
      // Predicated region
      $region37: #{autoshape_forward.1} parent=31 // pred_check
        %p241 = pneg %p122
      $region38: #{autoshape_forward.1} parent=31 // pred_check_branch
        %243 = sbr.rel (%p241) target = $region40
      $region39: #{autoshape_forward.1} parent=31 // pred_region
        %s244 = smul.u32 32, %s13
        %p245 = scmp.lt.s32.totalorder %s244, 63
        %s246 = scalar_select %p245, %s244, 63
        %s247 = smul.addr %s246, 8
        %s248 = scalar_lea.vmem %s4, %s247
        %s249 = smul.u32 32, %s13
      $region40: #{autoshape_forward.1} parent=31 // pred_fallthru
        _
      // Predicated region
      $region41: #{autoshape_forward.1} parent=31 // pred_check
        %p250 = pneg %p148
      $region42: #{autoshape_forward.1} parent=31 // pred_check_branch
        %252 = sbr.rel (%p250) target = $region44
      $region43: #{autoshape_forward.1} parent=31 // pred_region
        %s253 = smul.u32 32, %s13
        %p254 = scmp.lt.s32.totalorder %s253, 63
        %s255 = scalar_select %p254, %s253, 63
        %s256 = smul.addr %s255, 8
        %s257 = scalar_lea.vmem %s5, %s256
        %s258 = smul.u32 32, %s13
      $region44: #{autoshape_forward.1} parent=31 // pred_fallthru
        _
    $region32: #{autoshape_forward.1} parent=5 // pred_fallthru
      _
    %p259 = scmp.le.s32.totalorder 1, %s13
    %p260 = scmp.lt.s32.totalorder %s13, 3
    %p261 = pnand %p259, %p260
    %p262 = pneg %p261
    // Predicated region
    $region45: #{autoshape_forward.1} parent=5 // pred_check
      _
    $region46: #{autoshape_forward.1} parent=5 // pred_check_branch
      %264 = sbr.rel (%p261) target = $region48
    $region47: #{autoshape_forward.1} parent=5 // pred_region
      %s265 = ssub.s32 %s13, 1
      %s266 = smul.u32 32, %s18
      %p267 = scmp.lt.s32.totalorder %s266, 63
      %s268 = scalar_select %p267, %s266, 63
      %s269 = smul.addr %s268, 8
      %s270 = scalar_lea.vmem %s0, %s269
      %p271 = pneg %p39
      %p272 = pneg %p36
      %p273 = pneg %p60
      %p274 = pneg %p57
      %p275 = pneg %p81
      %p276 = pneg %p78
      %p277 = pneg %p102
      %p278 = pneg %p99
      %s279 = smul.u32 32, %s18
      %p280 = scmp.lt.s32.totalorder %s279, 63
      %s281 = scalar_select %p280, %s279, 63
      %s282 = smul.addr %s281, 8
      %s283 = scalar_lea.vmem %s4, %s282
      %p284 = pneg %p128
      %p285 = pneg %p125
      %s286 = smul.u32 32, %s18
      %p287 = scmp.lt.s32.totalorder %s286, 63
      %s288 = scalar_select %p287, %s286, 63
      %s289 = smul.addr %s288, 8
      %s290 = scalar_lea.vmem %s5, %s289
      %p291 = pneg %p154
      %p292 = pneg %p151
      %p293 = pneg %p175
      %p294 = pneg %p172
      %p295 = pneg %p201
      %p296 = pneg %p198
      %s297 = smul.u32 32, %s18
      %p298 = scmp.lt.s32.totalorder %s297, 63
      %s299 = scalar_select %p298, %s297, 63
      %s300 = smul.addr %s299, 8
      %s301 = scalar_lea.vmem %s7, %s300
      %s302 = smul.u32 32, %s18
      %p303 = scmp.lt.s32.totalorder %s302, 63
      %s304 = scalar_select %p303, %s302, 63
      %s305 = smul.addr %s304, 8
      %s306 = scalar_lea.vmem %s0, %s305
      %s307 = smul.u32 32, %s18
      %s308 = smul.u32 32, %s18
      %p309 = scmp.lt.s32.totalorder %s308, 63
      %s310 = scalar_select %p309, %s308, 63
      %s311 = smul.addr %s310, 8
      %s312 = scalar_lea.vmem %s4, %s311
      %s313 = smul.u32 32, %s18
      %s314 = smul.u32 32, %s18
      %p315 = scmp.lt.s32.totalorder %s314, 63
      %s316 = scalar_select %p315, %s314, 63
      %s317 = smul.addr %s316, 8
      %s318 = scalar_lea.vmem %s5, %s317
      %s319 = smul.u32 32, %s18
      %s320 = smul.u32 32, %s18
      %p321 = scmp.lt.s32.totalorder %s320, 63
      %s322 = scalar_select %p321, %s320, 63
      %s323 = smul.addr %s322, 8
      %s324 = scalar_lea.vmem %s7, %s323
      %s325 = smul.u32 32, %s18
      %v326 = vld [vmem:[%s306] sm:$0xff]
      %v327 = vld [vmem:[%s306 + $0x8] sm:$0xff]
      %v328 = vld [vmem:[%s306 + $0x10] sm:$0xff]
      %v329 = vld [vmem:[%s306 + $0x18] sm:$0xff]
      %v330 = vld [vmem:[%s306 + $0x20] sm:$0xff]
      %v331 = vld [vmem:[%s306 + $0x28] sm:$0xff]
      %v332 = vld [vmem:[%s306 + $0x30] sm:$0xff]
      %v333 = vld [vmem:[%s306 + $0x38] sm:$0xff]
      %v334 = vld [vmem:[%s306 + $0x40] sm:$0xff]
      %v335 = vld [vmem:[%s306 + $0x48] sm:$0xff]
      %v336 = vld [vmem:[%s306 + $0x50] sm:$0xff]
      %v337 = vld [vmem:[%s306 + $0x58] sm:$0xff]
      %v338 = vld [vmem:[%s306 + $0x60] sm:$0xff]
      %v339 = vld [vmem:[%s306 + $0x68] sm:$0xff]
      %v340 = vld [vmem:[%s306 + $0x70] sm:$0xff]
      %v341 = vld [vmem:[%s306 + $0x78] sm:$0xff]
      %v342 = vld [vmem:[%s306 + $0x80] sm:$0xff]
      %v343 = vld [vmem:[%s306 + $0x88] sm:$0xff]
      %v344 = vld [vmem:[%s306 + $0x90] sm:$0xff]
      %v345 = vld [vmem:[%s306 + $0x98] sm:$0xff]
      %v346 = vld [vmem:[%s306 + $0xa0] sm:$0xff]
      %v347 = vld [vmem:[%s306 + $0xa8] sm:$0xff]
      %v348 = vld [vmem:[%s306 + $0xb0] sm:$0xff]
      %v349 = vld [vmem:[%s306 + $0xb8] sm:$0xff]
      %v350 = vld [vmem:[%s306 + $0xc0] sm:$0xff]
      %v351 = vld [vmem:[%s306 + $0xc8] sm:$0xff]
      %v352 = vld [vmem:[%s306 + $0xd0] sm:$0xff]
      %v353 = vld [vmem:[%s306 + $0xd8] sm:$0xff]
      %v354 = vld [vmem:[%s306 + $0xe0] sm:$0xff]
      %v355 = vld [vmem:[%s306 + $0xe8] sm:$0xff]
      %v356 = vld [vmem:[%s306 + $0xf0] sm:$0xff]
      %v357 = vld [vmem:[%s306 + $0xf8] sm:$0xff]
      %v358 = vld [vmem:[%s1] sm:$0xff]
      %v359 = vld [vmem:[%s1 + $0x8] sm:$0xff]
      %v360 = vld [vmem:[%s1 + $0x10] sm:$0xff]
      %v361 = vld [vmem:[%s1 + $0x18] sm:$0xff]
      %vm362 = vcmask 261120
      %v364 = vsel %vm362, %v326, 0
      %v367 = vsel %vm362, %v327, 0
      %v370 = vsel %vm362, %v328, 0
      %v373 = vsel %vm362, %v329, 0
      %v376 = vsel %vm362, %v330, 0
      %v379 = vsel %vm362, %v331, 0
      %v382 = vsel %vm362, %v332, 0
      %v385 = vsel %vm362, %v333, 0
      %v388 = vsel %vm362, %v334, 0
      %v391 = vsel %vm362, %v335, 0
      %v394 = vsel %vm362, %v336, 0
      %v397 = vsel %vm362, %v337, 0
      %v400 = vsel %vm362, %v338, 0
      %v403 = vsel %vm362, %v339, 0
      %v406 = vsel %vm362, %v340, 0
      %v409 = vsel %vm362, %v341, 0
      %v412 = vsel %vm362, %v342, 0
      %v415 = vsel %vm362, %v343, 0
      %v418 = vsel %vm362, %v344, 0
      %v421 = vsel %vm362, %v345, 0
      %v424 = vsel %vm362, %v346, 0
      %v427 = vsel %vm362, %v347, 0
      %v430 = vsel %vm362, %v348, 0
      %v433 = vsel %vm362, %v349, 0
      %v436 = vsel %vm362, %v350, 0
      %v439 = vsel %vm362, %v351, 0
      %v442 = vsel %vm362, %v352, 0
      %v445 = vsel %vm362, %v353, 0
      %v448 = vsel %vm362, %v354, 0
      %v451 = vsel %vm362, %v355, 0
      %v454 = vsel %vm362, %v356, 0
      %v457 = vsel %vm362, %v357, 0
      %459 = vmatpush.msra.mxu0 0.0
      %460 = vmatpush.msra.mxu0 0.0
      %461 = vmatpush.msra.mxu0 0.0
      %462 = vmatpush.msra.mxu0 0.0
      %463 = vmatpush.msra.mxu0 0.0
      %464 = vmatpush.msra.mxu0 0.0
      %465 = vmatpush.msra.mxu0 0.0
      %466 = vmatpush.msra.mxu0 0.0
      %467 = vmatpush.msra.mxu0 0.0
      %468 = vmatpush.msra.mxu0 0.0
      %469 = vmatpush.msra.mxu0 0.0
      %470 = vmatpush.msra.mxu0 0.0
      %471 = vmatpush.msra.mxu0 %v361
      %472 = vmatpush.msra.mxu0 %v360
      %473 = vmatpush.msra.mxu0 %v359
      %474 = vmatpush.msra.mxu0 %v358
      %475 = vmatmul.f32.gmra.mxu0 %v364
      %v476 = vpop.f32.mrf.mxu0
      %v477 = vadd.f32 0.0, %v476
      %478 = vmatmul.f32.gmra.mxu0 %v367
      %v479 = vpop.f32.mrf.mxu0
      %v480 = vadd.f32 0.0, %v479
      %481 = vmatmul.f32.gmra.mxu0 %v370
      %v482 = vpop.f32.mrf.mxu0
      %v483 = vadd.f32 0.0, %v482
      %484 = vmatmul.f32.gmra.mxu0 %v373
      %v485 = vpop.f32.mrf.mxu0
      %v486 = vadd.f32 0.0, %v485
      %487 = vmatmul.f32.gmra.mxu0 %v376
      %v488 = vpop.f32.mrf.mxu0
      %v489 = vadd.f32 0.0, %v488
      %490 = vmatmul.f32.gmra.mxu0 %v379
      %v491 = vpop.f32.mrf.mxu0
      %v492 = vadd.f32 0.0, %v491
      %493 = vmatmul.f32.gmra.mxu0 %v382
      %v494 = vpop.f32.mrf.mxu0
      %v495 = vadd.f32 0.0, %v494
      %496 = vmatmul.f32.gmra.mxu0 %v385
      %v497 = vpop.f32.mrf.mxu0
      %v498 = vadd.f32 0.0, %v497
      %499 = vmatmul.f32.gmra.mxu0 %v388
      %v500 = vpop.f32.mrf.mxu0
      %v501 = vadd.f32 0.0, %v500
      %502 = vmatmul.f32.gmra.mxu0 %v391
      %v503 = vpop.f32.mrf.mxu0
      %v504 = vadd.f32 0.0, %v503
      %505 = vmatmul.f32.gmra.mxu0 %v394
      %v506 = vpop.f32.mrf.mxu0
      %v507 = vadd.f32 0.0, %v506
      %508 = vmatmul.f32.gmra.mxu0 %v397
      %v509 = vpop.f32.mrf.mxu0
      %v510 = vadd.f32 0.0, %v509
      %511 = vmatmul.f32.gmra.mxu0 %v400
      %v512 = vpop.f32.mrf.mxu0
      %v513 = vadd.f32 0.0, %v512
      %514 = vmatmul.f32.gmra.mxu0 %v403
      %v515 = vpop.f32.mrf.mxu0
      %v516 = vadd.f32 0.0, %v515
      %517 = vmatmul.f32.gmra.mxu0 %v406
      %v518 = vpop.f32.mrf.mxu0
      %v519 = vadd.f32 0.0, %v518
      %520 = vmatmul.f32.gmra.mxu0 %v409
      %v521 = vpop.f32.mrf.mxu0
      %v522 = vadd.f32 0.0, %v521
      %523 = vmatmul.f32.gmra.mxu0 %v412
      %v524 = vpop.f32.mrf.mxu0
      %v525 = vadd.f32 0.0, %v524
      %526 = vmatmul.f32.gmra.mxu0 %v415
      %v527 = vpop.f32.mrf.mxu0
      %v528 = vadd.f32 0.0, %v527
      %529 = vmatmul.f32.gmra.mxu0 %v418
      %v530 = vpop.f32.mrf.mxu0
      %v531 = vadd.f32 0.0, %v530
      %532 = vmatmul.f32.gmra.mxu0 %v421
      %v533 = vpop.f32.mrf.mxu0
      %v534 = vadd.f32 0.0, %v533
      %535 = vmatmul.f32.gmra.mxu0 %v424
      %v536 = vpop.f32.mrf.mxu0
      %v537 = vadd.f32 0.0, %v536
      %538 = vmatmul.f32.gmra.mxu0 %v427
      %v539 = vpop.f32.mrf.mxu0
      %v540 = vadd.f32 0.0, %v539
      %541 = vmatmul.f32.gmra.mxu0 %v430
      %v542 = vpop.f32.mrf.mxu0
      %v543 = vadd.f32 0.0, %v542
      %544 = vmatmul.f32.gmra.mxu0 %v433
      %v545 = vpop.f32.mrf.mxu0
      %v546 = vadd.f32 0.0, %v545
      %547 = vmatmul.f32.gmra.mxu0 %v436
      %v548 = vpop.f32.mrf.mxu0
      %v549 = vadd.f32 0.0, %v548
      %550 = vmatmul.f32.gmra.mxu0 %v439
      %v551 = vpop.f32.mrf.mxu0
      %v552 = vadd.f32 0.0, %v551
      %553 = vmatmul.f32.gmra.mxu0 %v442
      %v554 = vpop.f32.mrf.mxu0
      %v555 = vadd.f32 0.0, %v554
      %556 = vmatmul.f32.gmra.mxu0 %v445
      %v557 = vpop.f32.mrf.mxu0
      %v558 = vadd.f32 0.0, %v557
      %559 = vmatmul.f32.gmra.mxu0 %v448
      %v560 = vpop.f32.mrf.mxu0
      %v561 = vadd.f32 0.0, %v560
      %562 = vmatmul.f32.gmra.mxu0 %v451
      %v563 = vpop.f32.mrf.mxu0
      %v564 = vadd.f32 0.0, %v563
      %565 = vmatmul.f32.gmra.mxu0 %v454
      %v566 = vpop.f32.mrf.mxu0
      %v567 = vadd.f32 0.0, %v566
      %568 = vmatmul.f32.gmra.mxu0 %v457
      %v569 = vpop.f32.mrf.mxu0
      %v570 = vadd.f32 0.0, %v569
      %571 = vdwg.mxu0
      %v572 = vand.u32 2147483647, %v477
      %v573 = vand.u32 2147483647, %v480
      %v574 = vand.u32 2147483647, %v483
      %v575 = vand.u32 2147483647, %v486
      %v576 = vand.u32 2147483647, %v489
      %v577 = vand.u32 2147483647, %v492
      %v578 = vand.u32 2147483647, %v495
      %v579 = vand.u32 2147483647, %v498
      %v580 = vand.u32 2147483647, %v501
      %v581 = vand.u32 2147483647, %v504
      %v582 = vand.u32 2147483647, %v507
      %v583 = vand.u32 2147483647, %v510
      %v584 = vand.u32 2147483647, %v513
      %v585 = vand.u32 2147483647, %v516
      %v586 = vand.u32 2147483647, %v519
      %v587 = vand.u32 2147483647, %v522
      %v588 = vand.u32 2147483647, %v525
      %v589 = vand.u32 2147483647, %v528
      %v590 = vand.u32 2147483647, %v531
      %v591 = vand.u32 2147483647, %v534
      %v592 = vand.u32 2147483647, %v537
      %v593 = vand.u32 2147483647, %v540
      %v594 = vand.u32 2147483647, %v543
      %v595 = vand.u32 2147483647, %v546
      %v596 = vand.u32 2147483647, %v549
      %v597 = vand.u32 2147483647, %v552
      %v598 = vand.u32 2147483647, %v555
      %v599 = vand.u32 2147483647, %v558
      %v600 = vand.u32 2147483647, %v561
      %v601 = vand.u32 2147483647, %v564
      %v602 = vand.u32 2147483647, %v567
      %v603 = vand.u32 2147483647, %v570
      %v604 = vsub.f32 0.0, %v572
      %v605 = vsub.f32 0.0, %v573
      %v606 = vsub.f32 0.0, %v574
      %v607 = vsub.f32 0.0, %v575
      %v608 = vsub.f32 0.0, %v576
      %v609 = vsub.f32 0.0, %v577
      %v610 = vsub.f32 0.0, %v578
      %v611 = vsub.f32 0.0, %v579
      %v612 = vsub.f32 0.0, %v580
      %v613 = vsub.f32 0.0, %v581
      %v614 = vsub.f32 0.0, %v582
      %v615 = vsub.f32 0.0, %v583
      %v616 = vsub.f32 0.0, %v584
      %v617 = vsub.f32 0.0, %v585
      %v618 = vsub.f32 0.0, %v586
      %v619 = vsub.f32 0.0, %v587
      %v620 = vsub.f32 0.0, %v588
      %v621 = vsub.f32 0.0, %v589
      %v622 = vsub.f32 0.0, %v590
      %v623 = vsub.f32 0.0, %v591
      %v624 = vsub.f32 0.0, %v592
      %v625 = vsub.f32 0.0, %v593
      %v626 = vsub.f32 0.0, %v594
      %v627 = vsub.f32 0.0, %v595
      %v628 = vsub.f32 0.0, %v596
      %v629 = vsub.f32 0.0, %v597
      %v630 = vsub.f32 0.0, %v598
      %v631 = vsub.f32 0.0, %v599
      %v632 = vsub.f32 0.0, %v600
      %v633 = vsub.f32 0.0, %v601
      %v634 = vsub.f32 0.0, %v602
      %v635 = vsub.f32 0.0, %v603
      %v636 = vmul.f32 %v604, 1.442695
      %v637 = vpow.pop %v636
      %v638 = vmul.f32 %v605, 1.442695
      %v639 = vpow.pop %v638
      %v640 = vmul.f32 %v606, 1.442695
      %v641 = vpow.pop %v640
      %v642 = vmul.f32 %v607, 1.442695
      %v643 = vpow.pop %v642
      %v644 = vmul.f32 %v608, 1.442695
      %v645 = vpow.pop %v644
      %v646 = vmul.f32 %v609, 1.442695
      %v647 = vpow.pop %v646
      %v648 = vmul.f32 %v610, 1.442695
      %v649 = vpow.pop %v648
      %v650 = vmul.f32 %v611, 1.442695
      %v651 = vpow.pop %v650
      %v652 = vmul.f32 %v612, 1.442695
      %v653 = vpow.pop %v652
      %v654 = vmul.f32 %v613, 1.442695
      %v655 = vpow.pop %v654
      %v656 = vmul.f32 %v614, 1.442695
      %v657 = vpow.pop %v656
      %v658 = vmul.f32 %v615, 1.442695
      %v659 = vpow.pop %v658
      %v660 = vmul.f32 %v616, 1.442695
      %v661 = vpow.pop %v660
      %v662 = vmul.f32 %v617, 1.442695
      %v663 = vpow.pop %v662
      %v664 = vmul.f32 %v618, 1.442695
      %v665 = vpow.pop %v664
      %v666 = vmul.f32 %v619, 1.442695
      %v667 = vpow.pop %v666
      %v668 = vmul.f32 %v620, 1.442695
      %v669 = vpow.pop %v668
      %v670 = vmul.f32 %v621, 1.442695
      %v671 = vpow.pop %v670
      %v672 = vmul.f32 %v622, 1.442695
      %v673 = vpow.pop %v672
      %v674 = vmul.f32 %v623, 1.442695
      %v675 = vpow.pop %v674
      %v676 = vmul.f32 %v624, 1.442695
      %v677 = vpow.pop %v676
      %v678 = vmul.f32 %v625, 1.442695
      %v679 = vpow.pop %v678
      %v680 = vmul.f32 %v626, 1.442695
      %v681 = vpow.pop %v680
      %v682 = vmul.f32 %v627, 1.442695
      %v683 = vpow.pop %v682
      %v684 = vmul.f32 %v628, 1.442695
      %v685 = vpow.pop %v684
      %v686 = vmul.f32 %v629, 1.442695
      %v687 = vpow.pop %v686
      %v688 = vmul.f32 %v630, 1.442695
      %v689 = vpow.pop %v688
      %v690 = vmul.f32 %v631, 1.442695
      %v691 = vpow.pop %v690
      %v692 = vmul.f32 %v632, 1.442695
      %v693 = vpow.pop %v692
      %v694 = vmul.f32 %v633, 1.442695
      %v695 = vpow.pop %v694
      %v696 = vmul.f32 %v634, 1.442695
      %v697 = vpow.pop %v696
      %v698 = vmul.f32 %v635, 1.442695
      %v699 = vpow.pop %v698
      %v700 = vadd.f32 %v637, 1.0
      %v701 = vadd.f32 %v639, 1.0
      %v702 = vadd.f32 %v641, 1.0
      %v703 = vadd.f32 %v643, 1.0
      %v704 = vadd.f32 %v645, 1.0
      %v705 = vadd.f32 %v647, 1.0
      %v706 = vadd.f32 %v649, 1.0
      %v707 = vadd.f32 %v651, 1.0
      %v708 = vadd.f32 %v653, 1.0
      %v709 = vadd.f32 %v655, 1.0
      %v710 = vadd.f32 %v657, 1.0
      %v711 = vadd.f32 %v659, 1.0
      %v712 = vadd.f32 %v661, 1.0
      %v713 = vadd.f32 %v663, 1.0
      %v714 = vadd.f32 %v665, 1.0
      %v715 = vadd.f32 %v667, 1.0
      %v716 = vadd.f32 %v669, 1.0
      %v717 = vadd.f32 %v671, 1.0
      %v718 = vadd.f32 %v673, 1.0
      %v719 = vadd.f32 %v675, 1.0
      %v720 = vadd.f32 %v677, 1.0
      %v721 = vadd.f32 %v679, 1.0
      %v722 = vadd.f32 %v681, 1.0
      %v723 = vadd.f32 %v683, 1.0
      %v724 = vadd.f32 %v685, 1.0
      %v725 = vadd.f32 %v687, 1.0
      %v726 = vadd.f32 %v689, 1.0
      %v727 = vadd.f32 %v691, 1.0
      %v728 = vadd.f32 %v693, 1.0
      %v729 = vadd.f32 %v695, 1.0
      %v730 = vadd.f32 %v697, 1.0
      %v731 = vadd.f32 %v699, 1.0
      %v732 = vrcp.pop %v700
      %v733 = vrcp.pop %v701
      %v734 = vrcp.pop %v702
      %v735 = vrcp.pop %v703
      %v736 = vrcp.pop %v704
      %v737 = vrcp.pop %v705
      %v738 = vrcp.pop %v706
      %v739 = vrcp.pop %v707
      %v740 = vrcp.pop %v708
      %v741 = vrcp.pop %v709
      %v742 = vrcp.pop %v710
      %v743 = vrcp.pop %v711
      %v744 = vrcp.pop %v712
      %v745 = vrcp.pop %v713
      %v746 = vrcp.pop %v714
      %v747 = vrcp.pop %v715
      %v748 = vrcp.pop %v716
      %v749 = vrcp.pop %v717
      %v750 = vrcp.pop %v718
      %v751 = vrcp.pop %v719
      %v752 = vrcp.pop %v720
      %v753 = vrcp.pop %v721
      %v754 = vrcp.pop %v722
      %v755 = vrcp.pop %v723
      %v756 = vrcp.pop %v724
      %v757 = vrcp.pop %v725
      %v758 = vrcp.pop %v726
      %v759 = vrcp.pop %v727
      %v760 = vrcp.pop %v728
      %v761 = vrcp.pop %v729
      %v762 = vrcp.pop %v730
      %v763 = vrcp.pop %v731
      %vm764 = vcmp.ge.f32.partialorder %v477, 0.0
      %vm765 = vcmp.ge.f32.partialorder %v480, 0.0
      %vm766 = vcmp.ge.f32.partialorder %v483, 0.0
      %vm767 = vcmp.ge.f32.partialorder %v486, 0.0
      %vm768 = vcmp.ge.f32.partialorder %v489, 0.0
      %vm769 = vcmp.ge.f32.partialorder %v492, 0.0
      %vm770 = vcmp.ge.f32.partialorder %v495, 0.0
      %vm771 = vcmp.ge.f32.partialorder %v498, 0.0
      %vm772 = vcmp.ge.f32.partialorder %v501, 0.0
      %vm773 = vcmp.ge.f32.partialorder %v504, 0.0
      %vm774 = vcmp.ge.f32.partialorder %v507, 0.0
      %vm775 = vcmp.ge.f32.partialorder %v510, 0.0
      %vm776 = vcmp.ge.f32.partialorder %v513, 0.0
      %vm777 = vcmp.ge.f32.partialorder %v516, 0.0
      %vm778 = vcmp.ge.f32.partialorder %v519, 0.0
      %vm779 = vcmp.ge.f32.partialorder %v522, 0.0
      %vm780 = vcmp.ge.f32.partialorder %v525, 0.0
      %vm781 = vcmp.ge.f32.partialorder %v528, 0.0
      %vm782 = vcmp.ge.f32.partialorder %v531, 0.0
      %vm783 = vcmp.ge.f32.partialorder %v534, 0.0
      %vm784 = vcmp.ge.f32.partialorder %v537, 0.0
      %vm785 = vcmp.ge.f32.partialorder %v540, 0.0
      %vm786 = vcmp.ge.f32.partialorder %v543, 0.0
      %vm787 = vcmp.ge.f32.partialorder %v546, 0.0
      %vm788 = vcmp.ge.f32.partialorder %v549, 0.0
      %vm789 = vcmp.ge.f32.partialorder %v552, 0.0
      %vm790 = vcmp.ge.f32.partialorder %v555, 0.0
      %vm791 = vcmp.ge.f32.partialorder %v558, 0.0
      %vm792 = vcmp.ge.f32.partialorder %v561, 0.0
      %vm793 = vcmp.ge.f32.partialorder %v564, 0.0
      %vm794 = vcmp.ge.f32.partialorder %v567, 0.0
      %vm795 = vcmp.ge.f32.partialorder %v570, 0.0
      %v796 = vsub.f32 1.0, %v732
      %v797 = vsub.f32 1.0, %v733
      %v798 = vsub.f32 1.0, %v734
      %v799 = vsub.f32 1.0, %v735
      %v800 = vsub.f32 1.0, %v736
      %v801 = vsub.f32 1.0, %v737
      %v802 = vsub.f32 1.0, %v738
      %v803 = vsub.f32 1.0, %v739
      %v804 = vsub.f32 1.0, %v740
      %v805 = vsub.f32 1.0, %v741
      %v806 = vsub.f32 1.0, %v742
      %v807 = vsub.f32 1.0, %v743
      %v808 = vsub.f32 1.0, %v744
      %v809 = vsub.f32 1.0, %v745
      %v810 = vsub.f32 1.0, %v746
      %v811 = vsub.f32 1.0, %v747
      %v812 = vsub.f32 1.0, %v748
      %v813 = vsub.f32 1.0, %v749
      %v814 = vsub.f32 1.0, %v750
      %v815 = vsub.f32 1.0, %v751
      %v816 = vsub.f32 1.0, %v752
      %v817 = vsub.f32 1.0, %v753
      %v818 = vsub.f32 1.0, %v754
      %v819 = vsub.f32 1.0, %v755
      %v820 = vsub.f32 1.0, %v756
      %v821 = vsub.f32 1.0, %v757
      %v822 = vsub.f32 1.0, %v758
      %v823 = vsub.f32 1.0, %v759
      %v824 = vsub.f32 1.0, %v760
      %v825 = vsub.f32 1.0, %v761
      %v826 = vsub.f32 1.0, %v762
      %v827 = vsub.f32 1.0, %v763
      %v828 = vsel %vm764, %v732, %v796
      %v829 = vsel %vm765, %v733, %v797
      %v830 = vsel %vm766, %v734, %v798
      %v831 = vsel %vm767, %v735, %v799
      %v832 = vsel %vm768, %v736, %v800
      %v833 = vsel %vm769, %v737, %v801
      %v834 = vsel %vm770, %v738, %v802
      %v835 = vsel %vm771, %v739, %v803
      %v836 = vsel %vm772, %v740, %v804
      %v837 = vsel %vm773, %v741, %v805
      %v838 = vsel %vm774, %v742, %v806
      %v839 = vsel %vm775, %v743, %v807
      %v840 = vsel %vm776, %v744, %v808
      %v841 = vsel %vm777, %v745, %v809
      %v842 = vsel %vm778, %v746, %v810
      %v843 = vsel %vm779, %v747, %v811
      %v844 = vsel %vm780, %v748, %v812
      %v845 = vsel %vm781, %v749, %v813
      %v846 = vsel %vm782, %v750, %v814
      %v847 = vsel %vm783, %v751, %v815
      %v848 = vsel %vm784, %v752, %v816
      %v849 = vsel %vm785, %v753, %v817
      %v850 = vsel %vm786, %v754, %v818
      %v851 = vsel %vm787, %v755, %v819
      %v852 = vsel %vm788, %v756, %v820
      %v853 = vsel %vm789, %v757, %v821
      %v854 = vsel %vm790, %v758, %v822
      %v855 = vsel %vm791, %v759, %v823
      %v856 = vsel %vm792, %v760, %v824
      %v857 = vsel %vm793, %v761, %v825
      %v858 = vsel %vm794, %v762, %v826
      %v859 = vsel %vm795, %v763, %v827
      %v860 = vmul.f32 %v477, %v828
      %v861 = vmul.f32 %v480, %v829
      %v862 = vmul.f32 %v483, %v830
      %v863 = vmul.f32 %v486, %v831
      %v864 = vmul.f32 %v489, %v832
      %v865 = vmul.f32 %v492, %v833
      %v866 = vmul.f32 %v495, %v834
      %v867 = vmul.f32 %v498, %v835
      %v868 = vmul.f32 %v501, %v836
      %v869 = vmul.f32 %v504, %v837
      %v870 = vmul.f32 %v507, %v838
      %v871 = vmul.f32 %v510, %v839
      %v872 = vmul.f32 %v513, %v840
      %v873 = vmul.f32 %v516, %v841
      %v874 = vmul.f32 %v519, %v842
      %v875 = vmul.f32 %v522, %v843
      %v876 = vmul.f32 %v525, %v844
      %v877 = vmul.f32 %v528, %v845
      %v878 = vmul.f32 %v531, %v846
      %v879 = vmul.f32 %v534, %v847
      %v880 = vmul.f32 %v537, %v848
      %v881 = vmul.f32 %v540, %v849
      %v882 = vmul.f32 %v543, %v850
      %v883 = vmul.f32 %v546, %v851
      %v884 = vmul.f32 %v549, %v852
      %v885 = vmul.f32 %v552, %v853
      %v886 = vmul.f32 %v555, %v854
      %v887 = vmul.f32 %v558, %v855
      %v888 = vmul.f32 %v561, %v856
      %v889 = vmul.f32 %v564, %v857
      %v890 = vmul.f32 %v567, %v858
      %v891 = vmul.f32 %v570, %v859
      %v892 = vld [vmem:[%s2] sm:$0xff]
      %v893 = vld [vmem:[%s2 + $0x8] sm:$0xff]
      %v894 = vld [vmem:[%s2 + $0x10] sm:$0xff]
      %v895 = vld [vmem:[%s2 + $0x18] sm:$0xff]
      %v896 = vld [vmem:[%s3] sm:$0x1]
      %v898 = vperm.slane %v896, 0
      %v901 = vsel %vm362, %v860, 0
      %v904 = vsel %vm362, %v861, 0
      %v907 = vsel %vm362, %v862, 0
      %v910 = vsel %vm362, %v863, 0
      %v913 = vsel %vm362, %v864, 0
      %v916 = vsel %vm362, %v865, 0
      %v919 = vsel %vm362, %v866, 0
      %v922 = vsel %vm362, %v867, 0
      %v925 = vsel %vm362, %v868, 0
      %v928 = vsel %vm362, %v869, 0
      %v931 = vsel %vm362, %v870, 0
      %v934 = vsel %vm362, %v871, 0
      %v937 = vsel %vm362, %v872, 0
      %v940 = vsel %vm362, %v873, 0
      %v943 = vsel %vm362, %v874, 0
      %v946 = vsel %vm362, %v875, 0
      %v949 = vsel %vm362, %v876, 0
      %v952 = vsel %vm362, %v877, 0
      %v955 = vsel %vm362, %v878, 0
      %v958 = vsel %vm362, %v879, 0
      %v961 = vsel %vm362, %v880, 0
      %v964 = vsel %vm362, %v881, 0
      %v967 = vsel %vm362, %v882, 0
      %v970 = vsel %vm362, %v883, 0
      %v973 = vsel %vm362, %v884, 0
      %v976 = vsel %vm362, %v885, 0
      %v979 = vsel %vm362, %v886, 0
      %v982 = vsel %vm362, %v887, 0
      %v985 = vsel %vm362, %v888, 0
      %v988 = vsel %vm362, %v889, 0
      %v991 = vsel %vm362, %v890, 0
      %v994 = vsel %vm362, %v891, 0
      %996 = vmatpush.msra.mxu0 0.0
      %997 = vmatpush.msra.mxu0 0.0
      %998 = vmatpush.msra.mxu0 0.0
      %999 = vmatpush.msra.mxu0 0.0
      %1000 = vmatpush.msra.mxu0 0.0
      %1001 = vmatpush.msra.mxu0 0.0
      %1002 = vmatpush.msra.mxu0 0.0
      %1003 = vmatpush.msra.mxu0 0.0
      %1004 = vmatpush.msra.mxu0 0.0
      %1005 = vmatpush.msra.mxu0 0.0
      %1006 = vmatpush.msra.mxu0 0.0
      %1007 = vmatpush.msra.mxu0 0.0
      %1008 = vmatpush.msra.mxu0 %v895
      %1009 = vmatpush.msra.mxu0 %v894
      %1010 = vmatpush.msra.mxu0 %v893
      %1011 = vmatpush.msra.mxu0 %v892
      %1012 = vmatmul.f32.gmra.mxu0 %v901
      %v1013 = vpop.f32.mrf.mxu0
      %v1014 = vadd.f32 %v898, %v1013
      %1015 = vmatmul.f32.gmra.mxu0 %v904
      %v1016 = vpop.f32.mrf.mxu0
      %v1017 = vadd.f32 %v898, %v1016
      %1018 = vmatmul.f32.gmra.mxu0 %v907
      %v1019 = vpop.f32.mrf.mxu0
      %v1020 = vadd.f32 %v898, %v1019
      %1021 = vmatmul.f32.gmra.mxu0 %v910
      %v1022 = vpop.f32.mrf.mxu0
      %v1023 = vadd.f32 %v898, %v1022
      %1024 = vmatmul.f32.gmra.mxu0 %v913
      %v1025 = vpop.f32.mrf.mxu0
      %v1026 = vadd.f32 %v898, %v1025
      %1027 = vmatmul.f32.gmra.mxu0 %v916
      %v1028 = vpop.f32.mrf.mxu0
      %v1029 = vadd.f32 %v898, %v1028
      %1030 = vmatmul.f32.gmra.mxu0 %v919
      %v1031 = vpop.f32.mrf.mxu0
      %v1032 = vadd.f32 %v898, %v1031
      %1033 = vmatmul.f32.gmra.mxu0 %v922
      %v1034 = vpop.f32.mrf.mxu0
      %v1035 = vadd.f32 %v898, %v1034
      %1036 = vmatmul.f32.gmra.mxu0 %v925
      %v1037 = vpop.f32.mrf.mxu0
      %v1038 = vadd.f32 %v898, %v1037
      %1039 = vmatmul.f32.gmra.mxu0 %v928
      %v1040 = vpop.f32.mrf.mxu0
      %v1041 = vadd.f32 %v898, %v1040
      %1042 = vmatmul.f32.gmra.mxu0 %v931
      %v1043 = vpop.f32.mrf.mxu0
      %v1044 = vadd.f32 %v898, %v1043
      %1045 = vmatmul.f32.gmra.mxu0 %v934
      %v1046 = vpop.f32.mrf.mxu0
      %v1047 = vadd.f32 %v898, %v1046
      %1048 = vmatmul.f32.gmra.mxu0 %v937
      %v1049 = vpop.f32.mrf.mxu0
      %v1050 = vadd.f32 %v898, %v1049
      %1051 = vmatmul.f32.gmra.mxu0 %v940
      %v1052 = vpop.f32.mrf.mxu0
      %v1053 = vadd.f32 %v898, %v1052
      %1054 = vmatmul.f32.gmra.mxu0 %v943
      %v1055 = vpop.f32.mrf.mxu0
      %v1056 = vadd.f32 %v898, %v1055
      %1057 = vmatmul.f32.gmra.mxu0 %v946
      %v1058 = vpop.f32.mrf.mxu0
      %v1059 = vadd.f32 %v898, %v1058
      %1060 = vmatmul.f32.gmra.mxu0 %v949
      %v1061 = vpop.f32.mrf.mxu0
      %v1062 = vadd.f32 %v898, %v1061
      %1063 = vmatmul.f32.gmra.mxu0 %v952
      %v1064 = vpop.f32.mrf.mxu0
      %v1065 = vadd.f32 %v898, %v1064
      %1066 = vmatmul.f32.gmra.mxu0 %v955
      %v1067 = vpop.f32.mrf.mxu0
      %v1068 = vadd.f32 %v898, %v1067
      %1069 = vmatmul.f32.gmra.mxu0 %v958
      %v1070 = vpop.f32.mrf.mxu0
      %v1071 = vadd.f32 %v898, %v1070
      %1072 = vmatmul.f32.gmra.mxu0 %v961
      %v1073 = vpop.f32.mrf.mxu0
      %v1074 = vadd.f32 %v898, %v1073
      %1075 = vmatmul.f32.gmra.mxu0 %v964
      %v1076 = vpop.f32.mrf.mxu0
      %v1077 = vadd.f32 %v898, %v1076
      %1078 = vmatmul.f32.gmra.mxu0 %v967
      %v1079 = vpop.f32.mrf.mxu0
      %v1080 = vadd.f32 %v898, %v1079
      %1081 = vmatmul.f32.gmra.mxu0 %v970
      %v1082 = vpop.f32.mrf.mxu0
      %v1083 = vadd.f32 %v898, %v1082
      %1084 = vmatmul.f32.gmra.mxu0 %v973
      %v1085 = vpop.f32.mrf.mxu0
      %v1086 = vadd.f32 %v898, %v1085
      %1087 = vmatmul.f32.gmra.mxu0 %v976
      %v1088 = vpop.f32.mrf.mxu0
      %v1089 = vadd.f32 %v898, %v1088
      %1090 = vmatmul.f32.gmra.mxu0 %v979
      %v1091 = vpop.f32.mrf.mxu0
      %v1092 = vadd.f32 %v898, %v1091
      %1093 = vmatmul.f32.gmra.mxu0 %v982
      %v1094 = vpop.f32.mrf.mxu0
      %v1095 = vadd.f32 %v898, %v1094
      %1096 = vmatmul.f32.gmra.mxu0 %v985
      %v1097 = vpop.f32.mrf.mxu0
      %v1098 = vadd.f32 %v898, %v1097
      %1099 = vmatmul.f32.gmra.mxu0 %v988
      %v1100 = vpop.f32.mrf.mxu0
      %v1101 = vadd.f32 %v898, %v1100
      %1102 = vmatmul.f32.gmra.mxu0 %v991
      %v1103 = vpop.f32.mrf.mxu0
      %v1104 = vadd.f32 %v898, %v1103
      %1105 = vmatmul.f32.gmra.mxu0 %v994
      %v1106 = vpop.f32.mrf.mxu0
      %v1107 = vadd.f32 %v898, %v1106
      %1108 = vdwg.mxu0
      %v1109 = vand.u32 2147483647, %v1014
      %v1110 = vand.u32 2147483647, %v1017
      %v1111 = vand.u32 2147483647, %v1020
      %v1112 = vand.u32 2147483647, %v1023
      %v1113 = vand.u32 2147483647, %v1026
      %v1114 = vand.u32 2147483647, %v1029
      %v1115 = vand.u32 2147483647, %v1032
      %v1116 = vand.u32 2147483647, %v1035
      %v1117 = vand.u32 2147483647, %v1038
      %v1118 = vand.u32 2147483647, %v1041
      %v1119 = vand.u32 2147483647, %v1044
      %v1120 = vand.u32 2147483647, %v1047
      %v1121 = vand.u32 2147483647, %v1050
      %v1122 = vand.u32 2147483647, %v1053
      %v1123 = vand.u32 2147483647, %v1056
      %v1124 = vand.u32 2147483647, %v1059
      %v1125 = vand.u32 2147483647, %v1062
      %v1126 = vand.u32 2147483647, %v1065
      %v1127 = vand.u32 2147483647, %v1068
      %v1128 = vand.u32 2147483647, %v1071
      %v1129 = vand.u32 2147483647, %v1074
      %v1130 = vand.u32 2147483647, %v1077
      %v1131 = vand.u32 2147483647, %v1080
      %v1132 = vand.u32 2147483647, %v1083
      %v1133 = vand.u32 2147483647, %v1086
      %v1134 = vand.u32 2147483647, %v1089
      %v1135 = vand.u32 2147483647, %v1092
      %v1136 = vand.u32 2147483647, %v1095
      %v1137 = vand.u32 2147483647, %v1098
      %v1138 = vand.u32 2147483647, %v1101
      %v1139 = vand.u32 2147483647, %v1104
      %v1140 = vand.u32 2147483647, %v1107
      %v1141 = vsub.f32 0.0, %v1109
      %v1142 = vsub.f32 0.0, %v1110
      %v1143 = vsub.f32 0.0, %v1111
      %v1144 = vsub.f32 0.0, %v1112
      %v1145 = vsub.f32 0.0, %v1113
      %v1146 = vsub.f32 0.0, %v1114
      %v1147 = vsub.f32 0.0, %v1115
      %v1148 = vsub.f32 0.0, %v1116
      %v1149 = vsub.f32 0.0, %v1117
      %v1150 = vsub.f32 0.0, %v1118
      %v1151 = vsub.f32 0.0, %v1119
      %v1152 = vsub.f32 0.0, %v1120
      %v1153 = vsub.f32 0.0, %v1121
      %v1154 = vsub.f32 0.0, %v1122
      %v1155 = vsub.f32 0.0, %v1123
      %v1156 = vsub.f32 0.0, %v1124
      %v1157 = vsub.f32 0.0, %v1125
      %v1158 = vsub.f32 0.0, %v1126
      %v1159 = vsub.f32 0.0, %v1127
      %v1160 = vsub.f32 0.0, %v1128
      %v1161 = vsub.f32 0.0, %v1129
      %v1162 = vsub.f32 0.0, %v1130
      %v1163 = vsub.f32 0.0, %v1131
      %v1164 = vsub.f32 0.0, %v1132
      %v1165 = vsub.f32 0.0, %v1133
      %v1166 = vsub.f32 0.0, %v1134
      %v1167 = vsub.f32 0.0, %v1135
      %v1168 = vsub.f32 0.0, %v1136
      %v1169 = vsub.f32 0.0, %v1137
      %v1170 = vsub.f32 0.0, %v1138
      %v1171 = vsub.f32 0.0, %v1139
      %v1172 = vsub.f32 0.0, %v1140
      %v1173 = vmul.f32 %v1141, 1.442695
      %v1174 = vpow.pop %v1173
      %v1175 = vmul.f32 %v1142, 1.442695
      %v1176 = vpow.pop %v1175
      %v1177 = vmul.f32 %v1143, 1.442695
      %v1178 = vpow.pop %v1177
      %v1179 = vmul.f32 %v1144, 1.442695
      %v1180 = vpow.pop %v1179
      %v1181 = vmul.f32 %v1145, 1.442695
      %v1182 = vpow.pop %v1181
      %v1183 = vmul.f32 %v1146, 1.442695
      %v1184 = vpow.pop %v1183
      %v1185 = vmul.f32 %v1147, 1.442695
      %v1186 = vpow.pop %v1185
      %v1187 = vmul.f32 %v1148, 1.442695
      %v1188 = vpow.pop %v1187
      %v1189 = vmul.f32 %v1149, 1.442695
      %v1190 = vpow.pop %v1189
      %v1191 = vmul.f32 %v1150, 1.442695
      %v1192 = vpow.pop %v1191
      %v1193 = vmul.f32 %v1151, 1.442695
      %v1194 = vpow.pop %v1193
      %v1195 = vmul.f32 %v1152, 1.442695
      %v1196 = vpow.pop %v1195
      %v1197 = vmul.f32 %v1153, 1.442695
      %v1198 = vpow.pop %v1197
      %v1199 = vmul.f32 %v1154, 1.442695
      %v1200 = vpow.pop %v1199
      %v1201 = vmul.f32 %v1155, 1.442695
      %v1202 = vpow.pop %v1201
      %v1203 = vmul.f32 %v1156, 1.442695
      %v1204 = vpow.pop %v1203
      %v1205 = vmul.f32 %v1157, 1.442695
      %v1206 = vpow.pop %v1205
      %v1207 = vmul.f32 %v1158, 1.442695
      %v1208 = vpow.pop %v1207
      %v1209 = vmul.f32 %v1159, 1.442695
      %v1210 = vpow.pop %v1209
      %v1211 = vmul.f32 %v1160, 1.442695
      %v1212 = vpow.pop %v1211
      %v1213 = vmul.f32 %v1161, 1.442695
      %v1214 = vpow.pop %v1213
      %v1215 = vmul.f32 %v1162, 1.442695
      %v1216 = vpow.pop %v1215
      %v1217 = vmul.f32 %v1163, 1.442695
      %v1218 = vpow.pop %v1217
      %v1219 = vmul.f32 %v1164, 1.442695
      %v1220 = vpow.pop %v1219
      %v1221 = vmul.f32 %v1165, 1.442695
      %v1222 = vpow.pop %v1221
      %v1223 = vmul.f32 %v1166, 1.442695
      %v1224 = vpow.pop %v1223
      %v1225 = vmul.f32 %v1167, 1.442695
      %v1226 = vpow.pop %v1225
      %v1227 = vmul.f32 %v1168, 1.442695
      %v1228 = vpow.pop %v1227
      %v1229 = vmul.f32 %v1169, 1.442695
      %v1230 = vpow.pop %v1229
      %v1231 = vmul.f32 %v1170, 1.442695
      %v1232 = vpow.pop %v1231
      %v1233 = vmul.f32 %v1171, 1.442695
      %v1234 = vpow.pop %v1233
      %v1235 = vmul.f32 %v1172, 1.442695
      %v1236 = vpow.pop %v1235
      %v1237 = vadd.f32 %v1174, 1.0
      %v1238 = vadd.f32 %v1176, 1.0
      %v1239 = vadd.f32 %v1178, 1.0
      %v1240 = vadd.f32 %v1180, 1.0
      %v1241 = vadd.f32 %v1182, 1.0
      %v1242 = vadd.f32 %v1184, 1.0
      %v1243 = vadd.f32 %v1186, 1.0
      %v1244 = vadd.f32 %v1188, 1.0
      %v1245 = vadd.f32 %v1190, 1.0
      %v1246 = vadd.f32 %v1192, 1.0
      %v1247 = vadd.f32 %v1194, 1.0
      %v1248 = vadd.f32 %v1196, 1.0
      %v1249 = vadd.f32 %v1198, 1.0
      %v1250 = vadd.f32 %v1200, 1.0
      %v1251 = vadd.f32 %v1202, 1.0
      %v1252 = vadd.f32 %v1204, 1.0
      %v1253 = vadd.f32 %v1206, 1.0
      %v1254 = vadd.f32 %v1208, 1.0
      %v1255 = vadd.f32 %v1210, 1.0
      %v1256 = vadd.f32 %v1212, 1.0
      %v1257 = vadd.f32 %v1214, 1.0
      %v1258 = vadd.f32 %v1216, 1.0
      %v1259 = vadd.f32 %v1218, 1.0
      %v1260 = vadd.f32 %v1220, 1.0
      %v1261 = vadd.f32 %v1222, 1.0
      %v1262 = vadd.f32 %v1224, 1.0
      %v1263 = vadd.f32 %v1226, 1.0
      %v1264 = vadd.f32 %v1228, 1.0
      %v1265 = vadd.f32 %v1230, 1.0
      %v1266 = vadd.f32 %v1232, 1.0
      %v1267 = vadd.f32 %v1234, 1.0
      %v1268 = vadd.f32 %v1236, 1.0
      %v1269 = vrcp.pop %v1237
      %v1270 = vrcp.pop %v1238
      %v1271 = vrcp.pop %v1239
      %v1272 = vrcp.pop %v1240
      %v1273 = vrcp.pop %v1241
      %v1274 = vrcp.pop %v1242
      %v1275 = vrcp.pop %v1243
      %v1276 = vrcp.pop %v1244
      %v1277 = vrcp.pop %v1245
      %v1278 = vrcp.pop %v1246
      %v1279 = vrcp.pop %v1247
      %v1280 = vrcp.pop %v1248
      %v1281 = vrcp.pop %v1249
      %v1282 = vrcp.pop %v1250
      %v1283 = vrcp.pop %v1251
      %v1284 = vrcp.pop %v1252
      %v1285 = vrcp.pop %v1253
      %v1286 = vrcp.pop %v1254
      %v1287 = vrcp.pop %v1255
      %v1288 = vrcp.pop %v1256
      %v1289 = vrcp.pop %v1257
      %v1290 = vrcp.pop %v1258
      %v1291 = vrcp.pop %v1259
      %v1292 = vrcp.pop %v1260
      %v1293 = vrcp.pop %v1261
      %v1294 = vrcp.pop %v1262
      %v1295 = vrcp.pop %v1263
      %v1296 = vrcp.pop %v1264
      %v1297 = vrcp.pop %v1265
      %v1298 = vrcp.pop %v1266
      %v1299 = vrcp.pop %v1267
      %v1300 = vrcp.pop %v1268
      %vm1301 = vcmp.ge.f32.partialorder %v1014, 0.0
      %vm1302 = vcmp.ge.f32.partialorder %v1017, 0.0
      %vm1303 = vcmp.ge.f32.partialorder %v1020, 0.0
      %vm1304 = vcmp.ge.f32.partialorder %v1023, 0.0
      %vm1305 = vcmp.ge.f32.partialorder %v1026, 0.0
      %vm1306 = vcmp.ge.f32.partialorder %v1029, 0.0
      %vm1307 = vcmp.ge.f32.partialorder %v1032, 0.0
      %vm1308 = vcmp.ge.f32.partialorder %v1035, 0.0
      %vm1309 = vcmp.ge.f32.partialorder %v1038, 0.0
      %vm1310 = vcmp.ge.f32.partialorder %v1041, 0.0
      %vm1311 = vcmp.ge.f32.partialorder %v1044, 0.0
      %vm1312 = vcmp.ge.f32.partialorder %v1047, 0.0
      %vm1313 = vcmp.ge.f32.partialorder %v1050, 0.0
      %vm1314 = vcmp.ge.f32.partialorder %v1053, 0.0
      %vm1315 = vcmp.ge.f32.partialorder %v1056, 0.0
      %vm1316 = vcmp.ge.f32.partialorder %v1059, 0.0
      %vm1317 = vcmp.ge.f32.partialorder %v1062, 0.0
      %vm1318 = vcmp.ge.f32.partialorder %v1065, 0.0
      %vm1319 = vcmp.ge.f32.partialorder %v1068, 0.0
      %vm1320 = vcmp.ge.f32.partialorder %v1071, 0.0
      %vm1321 = vcmp.ge.f32.partialorder %v1074, 0.0
      %vm1322 = vcmp.ge.f32.partialorder %v1077, 0.0
      %vm1323 = vcmp.ge.f32.partialorder %v1080, 0.0
      %vm1324 = vcmp.ge.f32.partialorder %v1083, 0.0
      %vm1325 = vcmp.ge.f32.partialorder %v1086, 0.0
      %vm1326 = vcmp.ge.f32.partialorder %v1089, 0.0
      %vm1327 = vcmp.ge.f32.partialorder %v1092, 0.0
      %vm1328 = vcmp.ge.f32.partialorder %v1095, 0.0
      %vm1329 = vcmp.ge.f32.partialorder %v1098, 0.0
      %vm1330 = vcmp.ge.f32.partialorder %v1101, 0.0
      %vm1331 = vcmp.ge.f32.partialorder %v1104, 0.0
      %vm1332 = vcmp.ge.f32.partialorder %v1107, 0.0
      %v1333 = vsub.f32 1.0, %v1269
      %v1334 = vsub.f32 1.0, %v1270
      %v1335 = vsub.f32 1.0, %v1271
      %v1336 = vsub.f32 1.0, %v1272
      %v1337 = vsub.f32 1.0, %v1273
      %v1338 = vsub.f32 1.0, %v1274
      %v1339 = vsub.f32 1.0, %v1275
      %v1340 = vsub.f32 1.0, %v1276
      %v1341 = vsub.f32 1.0, %v1277
      %v1342 = vsub.f32 1.0, %v1278
      %v1343 = vsub.f32 1.0, %v1279
      %v1344 = vsub.f32 1.0, %v1280
      %v1345 = vsub.f32 1.0, %v1281
      %v1346 = vsub.f32 1.0, %v1282
      %v1347 = vsub.f32 1.0, %v1283
      %v1348 = vsub.f32 1.0, %v1284
      %v1349 = vsub.f32 1.0, %v1285
      %v1350 = vsub.f32 1.0, %v1286
      %v1351 = vsub.f32 1.0, %v1287
      %v1352 = vsub.f32 1.0, %v1288
      %v1353 = vsub.f32 1.0, %v1289
      %v1354 = vsub.f32 1.0, %v1290
      %v1355 = vsub.f32 1.0, %v1291
      %v1356 = vsub.f32 1.0, %v1292
      %v1357 = vsub.f32 1.0, %v1293
      %v1358 = vsub.f32 1.0, %v1294
      %v1359 = vsub.f32 1.0, %v1295
      %v1360 = vsub.f32 1.0, %v1296
      %v1361 = vsub.f32 1.0, %v1297
      %v1362 = vsub.f32 1.0, %v1298
      %v1363 = vsub.f32 1.0, %v1299
      %v1364 = vsub.f32 1.0, %v1300
      %v1365 = vsel %vm1301, %v1269, %v1333
      %v1366 = vsel %vm1302, %v1270, %v1334
      %v1367 = vsel %vm1303, %v1271, %v1335
      %v1368 = vsel %vm1304, %v1272, %v1336
      %v1369 = vsel %vm1305, %v1273, %v1337
      %v1370 = vsel %vm1306, %v1274, %v1338
      %v1371 = vsel %vm1307, %v1275, %v1339
      %v1372 = vsel %vm1308, %v1276, %v1340
      %v1373 = vsel %vm1309, %v1277, %v1341
      %v1374 = vsel %vm1310, %v1278, %v1342
      %v1375 = vsel %vm1311, %v1279, %v1343
      %v1376 = vsel %vm1312, %v1280, %v1344
      %v1377 = vsel %vm1313, %v1281, %v1345
      %v1378 = vsel %vm1314, %v1282, %v1346
      %v1379 = vsel %vm1315, %v1283, %v1347
      %v1380 = vsel %vm1316, %v1284, %v1348
      %v1381 = vsel %vm1317, %v1285, %v1349
      %v1382 = vsel %vm1318, %v1286, %v1350
      %v1383 = vsel %vm1319, %v1287, %v1351
      %v1384 = vsel %vm1320, %v1288, %v1352
      %v1385 = vsel %vm1321, %v1289, %v1353
      %v1386 = vsel %vm1322, %v1290, %v1354
      %v1387 = vsel %vm1323, %v1291, %v1355
      %v1388 = vsel %vm1324, %v1292, %v1356
      %v1389 = vsel %vm1325, %v1293, %v1357
      %v1390 = vsel %vm1326, %v1294, %v1358
      %v1391 = vsel %vm1327, %v1295, %v1359
      %v1392 = vsel %vm1328, %v1296, %v1360
      %v1393 = vsel %vm1329, %v1297, %v1361
      %v1394 = vsel %vm1330, %v1298, %v1362
      %v1395 = vsel %vm1331, %v1299, %v1363
      %v1396 = vsel %vm1332, %v1300, %v1364
      %v1397 = vld [vmem:[%s6] sm:$0xff]
      %v1398 = vld [vmem:[%s312] sm:$0xff]
      %v1399 = vld [vmem:[%s312 + $0x8] sm:$0xff]
      %v1400 = vld [vmem:[%s312 + $0x10] sm:$0xff]
      %v1401 = vld [vmem:[%s312 + $0x18] sm:$0xff]
      %v1402 = vld [vmem:[%s312 + $0x20] sm:$0xff]
      %v1403 = vld [vmem:[%s312 + $0x28] sm:$0xff]
      %v1404 = vld [vmem:[%s312 + $0x30] sm:$0xff]
      %v1405 = vld [vmem:[%s312 + $0x38] sm:$0xff]
      %v1406 = vld [vmem:[%s312 + $0x40] sm:$0xff]
      %v1407 = vld [vmem:[%s312 + $0x48] sm:$0xff]
      %v1408 = vld [vmem:[%s312 + $0x50] sm:$0xff]
      %v1409 = vld [vmem:[%s312 + $0x58] sm:$0xff]
      %v1410 = vld [vmem:[%s312 + $0x60] sm:$0xff]
      %v1411 = vld [vmem:[%s312 + $0x68] sm:$0xff]
      %v1412 = vld [vmem:[%s312 + $0x70] sm:$0xff]
      %v1413 = vld [vmem:[%s312 + $0x78] sm:$0xff]
      %v1414 = vld [vmem:[%s312 + $0x80] sm:$0xff]
      %v1415 = vld [vmem:[%s312 + $0x88] sm:$0xff]
      %v1416 = vld [vmem:[%s312 + $0x90] sm:$0xff]
      %v1417 = vld [vmem:[%s312 + $0x98] sm:$0xff]
      %v1418 = vld [vmem:[%s312 + $0xa0] sm:$0xff]
      %v1419 = vld [vmem:[%s312 + $0xa8] sm:$0xff]
      %v1420 = vld [vmem:[%s312 + $0xb0] sm:$0xff]
      %v1421 = vld [vmem:[%s312 + $0xb8] sm:$0xff]
      %v1422 = vld [vmem:[%s312 + $0xc0] sm:$0xff]
      %v1423 = vld [vmem:[%s312 + $0xc8] sm:$0xff]
      %v1424 = vld [vmem:[%s312 + $0xd0] sm:$0xff]
      %v1425 = vld [vmem:[%s312 + $0xd8] sm:$0xff]
      %v1426 = vld [vmem:[%s312 + $0xe0] sm:$0xff]
      %v1427 = vld [vmem:[%s312 + $0xe8] sm:$0xff]
      %v1428 = vld [vmem:[%s312 + $0xf0] sm:$0xff]
      %v1429 = vld [vmem:[%s312 + $0xf8] sm:$0xff]
      %v1430 = vld [vmem:[%s318] sm:$0xff]
      %v1431 = vld [vmem:[%s318 + $0x8] sm:$0xff]
      %v1432 = vld [vmem:[%s318 + $0x10] sm:$0xff]
      %v1433 = vld [vmem:[%s318 + $0x18] sm:$0xff]
      %v1434 = vld [vmem:[%s318 + $0x20] sm:$0xff]
      %v1435 = vld [vmem:[%s318 + $0x28] sm:$0xff]
      %v1436 = vld [vmem:[%s318 + $0x30] sm:$0xff]
      %v1437 = vld [vmem:[%s318 + $0x38] sm:$0xff]
      %v1438 = vld [vmem:[%s318 + $0x40] sm:$0xff]
      %v1439 = vld [vmem:[%s318 + $0x48] sm:$0xff]
      %v1440 = vld [vmem:[%s318 + $0x50] sm:$0xff]
      %v1441 = vld [vmem:[%s318 + $0x58] sm:$0xff]
      %v1442 = vld [vmem:[%s318 + $0x60] sm:$0xff]
      %v1443 = vld [vmem:[%s318 + $0x68] sm:$0xff]
      %v1444 = vld [vmem:[%s318 + $0x70] sm:$0xff]
      %v1445 = vld [vmem:[%s318 + $0x78] sm:$0xff]
      %v1446 = vld [vmem:[%s318 + $0x80] sm:$0xff]
      %v1447 = vld [vmem:[%s318 + $0x88] sm:$0xff]
      %v1448 = vld [vmem:[%s318 + $0x90] sm:$0xff]
      %v1449 = vld [vmem:[%s318 + $0x98] sm:$0xff]
      %v1450 = vld [vmem:[%s318 + $0xa0] sm:$0xff]
      %v1451 = vld [vmem:[%s318 + $0xa8] sm:$0xff]
      %v1452 = vld [vmem:[%s318 + $0xb0] sm:$0xff]
      %v1453 = vld [vmem:[%s318 + $0xb8] sm:$0xff]
      %v1454 = vld [vmem:[%s318 + $0xc0] sm:$0xff]
      %v1455 = vld [vmem:[%s318 + $0xc8] sm:$0xff]
      %v1456 = vld [vmem:[%s318 + $0xd0] sm:$0xff]
      %v1457 = vld [vmem:[%s318 + $0xd8] sm:$0xff]
      %v1458 = vld [vmem:[%s318 + $0xe0] sm:$0xff]
      %v1459 = vld [vmem:[%s318 + $0xe8] sm:$0xff]
      %v1460 = vld [vmem:[%s318 + $0xf0] sm:$0xff]
      %v1461 = vld [vmem:[%s318 + $0xf8] sm:$0xff]
      %v1462 = vperm.slane %v1397, 0
      %v1463 = vmul.f32 %v1462, %v1365
      %v1464 = vmul.f32 %v1462, %v1366
      %v1465 = vmul.f32 %v1462, %v1367
      %v1466 = vmul.f32 %v1462, %v1368
      %v1467 = vmul.f32 %v1462, %v1369
      %v1468 = vmul.f32 %v1462, %v1370
      %v1469 = vmul.f32 %v1462, %v1371
      %v1470 = vmul.f32 %v1462, %v1372
      %v1471 = vmul.f32 %v1462, %v1373
      %v1472 = vmul.f32 %v1462, %v1374
      %v1473 = vmul.f32 %v1462, %v1375
      %v1474 = vmul.f32 %v1462, %v1376
      %v1475 = vmul.f32 %v1462, %v1377
      %v1476 = vmul.f32 %v1462, %v1378
      %v1477 = vmul.f32 %v1462, %v1379
      %v1478 = vmul.f32 %v1462, %v1380
      %v1479 = vmul.f32 %v1462, %v1381
      %v1480 = vmul.f32 %v1462, %v1382
      %v1481 = vmul.f32 %v1462, %v1383
      %v1482 = vmul.f32 %v1462, %v1384
      %v1483 = vmul.f32 %v1462, %v1385
      %v1484 = vmul.f32 %v1462, %v1386
      %v1485 = vmul.f32 %v1462, %v1387
      %v1486 = vmul.f32 %v1462, %v1388
      %v1487 = vmul.f32 %v1462, %v1389
      %v1488 = vmul.f32 %v1462, %v1390
      %v1489 = vmul.f32 %v1462, %v1391
      %v1490 = vmul.f32 %v1462, %v1392
      %v1491 = vmul.f32 %v1462, %v1393
      %v1492 = vmul.f32 %v1462, %v1394
      %v1493 = vmul.f32 %v1462, %v1395
      %v1494 = vmul.f32 %v1462, %v1396
      %v1495 = vmul.f32 %v1365, %v1365
      %v1496 = vmul.f32 %v1366, %v1366
      %v1497 = vmul.f32 %v1367, %v1367
      %v1498 = vmul.f32 %v1368, %v1368
      %v1499 = vmul.f32 %v1369, %v1369
      %v1500 = vmul.f32 %v1370, %v1370
      %v1501 = vmul.f32 %v1371, %v1371
      %v1502 = vmul.f32 %v1372, %v1372
      %v1503 = vmul.f32 %v1373, %v1373
      %v1504 = vmul.f32 %v1374, %v1374
      %v1505 = vmul.f32 %v1375, %v1375
      %v1506 = vmul.f32 %v1376, %v1376
      %v1507 = vmul.f32 %v1377, %v1377
      %v1508 = vmul.f32 %v1378, %v1378
      %v1509 = vmul.f32 %v1379, %v1379
      %v1510 = vmul.f32 %v1380, %v1380
      %v1511 = vmul.f32 %v1381, %v1381
      %v1512 = vmul.f32 %v1382, %v1382
      %v1513 = vmul.f32 %v1383, %v1383
      %v1514 = vmul.f32 %v1384, %v1384
      %v1515 = vmul.f32 %v1385, %v1385
      %v1516 = vmul.f32 %v1386, %v1386
      %v1517 = vmul.f32 %v1387, %v1387
      %v1518 = vmul.f32 %v1388, %v1388
      %v1519 = vmul.f32 %v1389, %v1389
      %v1520 = vmul.f32 %v1390, %v1390
      %v1521 = vmul.f32 %v1391, %v1391
      %v1522 = vmul.f32 %v1392, %v1392
      %v1523 = vmul.f32 %v1393, %v1393
      %v1524 = vmul.f32 %v1394, %v1394
      %v1525 = vmul.f32 %v1395, %v1395
      %v1526 = vmul.f32 %v1396, %v1396
      %v1527 = vperm.slane %v1397, 1
      %v1528 = vmul.f32 %v1527, %v1495
      %v1529 = vmul.f32 %v1527, %v1496
      %v1530 = vmul.f32 %v1527, %v1497
      %v1531 = vmul.f32 %v1527, %v1498
      %v1532 = vmul.f32 %v1527, %v1499
      %v1533 = vmul.f32 %v1527, %v1500
      %v1534 = vmul.f32 %v1527, %v1501
      %v1535 = vmul.f32 %v1527, %v1502
      %v1536 = vmul.f32 %v1527, %v1503
      %v1537 = vmul.f32 %v1527, %v1504
      %v1538 = vmul.f32 %v1527, %v1505
      %v1539 = vmul.f32 %v1527, %v1506
      %v1540 = vmul.f32 %v1527, %v1507
      %v1541 = vmul.f32 %v1527, %v1508
      %v1542 = vmul.f32 %v1527, %v1509
      %v1543 = vmul.f32 %v1527, %v1510
      %v1544 = vmul.f32 %v1527, %v1511
      %v1545 = vmul.f32 %v1527, %v1512
      %v1546 = vmul.f32 %v1527, %v1513
      %v1547 = vmul.f32 %v1527, %v1514
      %v1548 = vmul.f32 %v1527, %v1515
      %v1549 = vmul.f32 %v1527, %v1516
      %v1550 = vmul.f32 %v1527, %v1517
      %v1551 = vmul.f32 %v1527, %v1518
      %v1552 = vmul.f32 %v1527, %v1519
      %v1553 = vmul.f32 %v1527, %v1520
      %v1554 = vmul.f32 %v1527, %v1521
      %v1555 = vmul.f32 %v1527, %v1522
      %v1556 = vmul.f32 %v1527, %v1523
      %v1557 = vmul.f32 %v1527, %v1524
      %v1558 = vmul.f32 %v1527, %v1525
      %v1559 = vmul.f32 %v1527, %v1526
      %v1560 = vadd.f32 %v1463, %v1528
      %v1561 = vadd.f32 %v1464, %v1529
      %v1562 = vadd.f32 %v1465, %v1530
      %v1563 = vadd.f32 %v1466, %v1531
      %v1564 = vadd.f32 %v1467, %v1532
      %v1565 = vadd.f32 %v1468, %v1533
      %v1566 = vadd.f32 %v1469, %v1534
      %v1567 = vadd.f32 %v1470, %v1535
      %v1568 = vadd.f32 %v1471, %v1536
      %v1569 = vadd.f32 %v1472, %v1537
      %v1570 = vadd.f32 %v1473, %v1538
      %v1571 = vadd.f32 %v1474, %v1539
      %v1572 = vadd.f32 %v1475, %v1540
      %v1573 = vadd.f32 %v1476, %v1541
      %v1574 = vadd.f32 %v1477, %v1542
      %v1575 = vadd.f32 %v1478, %v1543
      %v1576 = vadd.f32 %v1479, %v1544
      %v1577 = vadd.f32 %v1480, %v1545
      %v1578 = vadd.f32 %v1481, %v1546
      %v1579 = vadd.f32 %v1482, %v1547
      %v1580 = vadd.f32 %v1483, %v1548
      %v1581 = vadd.f32 %v1484, %v1549
      %v1582 = vadd.f32 %v1485, %v1550
      %v1583 = vadd.f32 %v1486, %v1551
      %v1584 = vadd.f32 %v1487, %v1552
      %v1585 = vadd.f32 %v1488, %v1553
      %v1586 = vadd.f32 %v1489, %v1554
      %v1587 = vadd.f32 %v1490, %v1555
      %v1588 = vadd.f32 %v1491, %v1556
      %v1589 = vadd.f32 %v1492, %v1557
      %v1590 = vadd.f32 %v1493, %v1558
      %v1591 = vadd.f32 %v1494, %v1559
      %v1592 = vperm.slane %v1397, 2
      %1594 = vset.pattern.permute.xlu0 0
      %1595 = vperm.xlu0 %1594, %v1398
      %v1596 = vpop.permute.xlu0 %1595
      %1599 = vset.pattern.permute.xlu0 0
      %1600 = vperm.xlu0 %1599, %v1399
      %v1601 = vpop.permute.xlu0 %1600
      %1604 = vset.pattern.permute.xlu0 0
      %1605 = vperm.xlu0 %1604, %v1400
      %v1606 = vpop.permute.xlu0 %1605
      %1609 = vset.pattern.permute.xlu0 0
      %1610 = vperm.xlu0 %1609, %v1401
      %v1611 = vpop.permute.xlu0 %1610
      %1614 = vset.pattern.permute.xlu0 0
      %1615 = vperm.xlu0 %1614, %v1402
      %v1616 = vpop.permute.xlu0 %1615
      %1619 = vset.pattern.permute.xlu0 0
      %1620 = vperm.xlu0 %1619, %v1403
      %v1621 = vpop.permute.xlu0 %1620
      %1624 = vset.pattern.permute.xlu0 0
      %1625 = vperm.xlu0 %1624, %v1404
      %v1626 = vpop.permute.xlu0 %1625
      %1629 = vset.pattern.permute.xlu0 0
      %1630 = vperm.xlu0 %1629, %v1405
      %v1631 = vpop.permute.xlu0 %1630
      %1634 = vset.pattern.permute.xlu0 0
      %1635 = vperm.xlu0 %1634, %v1406
      %v1636 = vpop.permute.xlu0 %1635
      %1639 = vset.pattern.permute.xlu0 0
      %1640 = vperm.xlu0 %1639, %v1407
      %v1641 = vpop.permute.xlu0 %1640
      %1644 = vset.pattern.permute.xlu0 0
      %1645 = vperm.xlu0 %1644, %v1408
      %v1646 = vpop.permute.xlu0 %1645
      %1649 = vset.pattern.permute.xlu0 0
      %1650 = vperm.xlu0 %1649, %v1409
      %v1651 = vpop.permute.xlu0 %1650
      %1654 = vset.pattern.permute.xlu0 0
      %1655 = vperm.xlu0 %1654, %v1410
      %v1656 = vpop.permute.xlu0 %1655
      %1659 = vset.pattern.permute.xlu0 0
      %1660 = vperm.xlu0 %1659, %v1411
      %v1661 = vpop.permute.xlu0 %1660
      %1664 = vset.pattern.permute.xlu0 0
      %1665 = vperm.xlu0 %1664, %v1412
      %v1666 = vpop.permute.xlu0 %1665
      %1669 = vset.pattern.permute.xlu0 0
      %1670 = vperm.xlu0 %1669, %v1413
      %v1671 = vpop.permute.xlu0 %1670
      %1674 = vset.pattern.permute.xlu0 0
      %1675 = vperm.xlu0 %1674, %v1414
      %v1676 = vpop.permute.xlu0 %1675
      %1679 = vset.pattern.permute.xlu0 0
      %1680 = vperm.xlu0 %1679, %v1415
      %v1681 = vpop.permute.xlu0 %1680
      %1684 = vset.pattern.permute.xlu0 0
      %1685 = vperm.xlu0 %1684, %v1416
      %v1686 = vpop.permute.xlu0 %1685
      %1689 = vset.pattern.permute.xlu0 0
      %1690 = vperm.xlu0 %1689, %v1417
      %v1691 = vpop.permute.xlu0 %1690
      %1694 = vset.pattern.permute.xlu0 0
      %1695 = vperm.xlu0 %1694, %v1418
      %v1696 = vpop.permute.xlu0 %1695
      %1699 = vset.pattern.permute.xlu0 0
      %1700 = vperm.xlu0 %1699, %v1419
      %v1701 = vpop.permute.xlu0 %1700
      %1704 = vset.pattern.permute.xlu0 0
      %1705 = vperm.xlu0 %1704, %v1420
      %v1706 = vpop.permute.xlu0 %1705
      %1709 = vset.pattern.permute.xlu0 0
      %1710 = vperm.xlu0 %1709, %v1421
      %v1711 = vpop.permute.xlu0 %1710
      %1714 = vset.pattern.permute.xlu0 0
      %1715 = vperm.xlu0 %1714, %v1422
      %v1716 = vpop.permute.xlu0 %1715
      %1719 = vset.pattern.permute.xlu0 0
      %1720 = vperm.xlu0 %1719, %v1423
      %v1721 = vpop.permute.xlu0 %1720
      %1724 = vset.pattern.permute.xlu0 0
      %1725 = vperm.xlu0 %1724, %v1424
      %v1726 = vpop.permute.xlu0 %1725
      %1729 = vset.pattern.permute.xlu0 0
      %1730 = vperm.xlu0 %1729, %v1425
      %v1731 = vpop.permute.xlu0 %1730
      %1734 = vset.pattern.permute.xlu0 0
      %1735 = vperm.xlu0 %1734, %v1426
      %v1736 = vpop.permute.xlu0 %1735
      %1739 = vset.pattern.permute.xlu0 0
      %1740 = vperm.xlu0 %1739, %v1427
      %v1741 = vpop.permute.xlu0 %1740
      %1744 = vset.pattern.permute.xlu0 0
      %1745 = vperm.xlu0 %1744, %v1428
      %v1746 = vpop.permute.xlu0 %1745
      %1749 = vset.pattern.permute.xlu0 0
      %1750 = vperm.xlu0 %1749, %v1429
      %v1751 = vpop.permute.xlu0 %1750
      %v1753 = vmul.f32 %v1592, %v1596
      %v1754 = vmul.f32 %v1592, %v1601
      %v1755 = vmul.f32 %v1592, %v1606
      %v1756 = vmul.f32 %v1592, %v1611
      %v1757 = vmul.f32 %v1592, %v1616
      %v1758 = vmul.f32 %v1592, %v1621
      %v1759 = vmul.f32 %v1592, %v1626
      %v1760 = vmul.f32 %v1592, %v1631
      %v1761 = vmul.f32 %v1592, %v1636
      %v1762 = vmul.f32 %v1592, %v1641
      %v1763 = vmul.f32 %v1592, %v1646
      %v1764 = vmul.f32 %v1592, %v1651
      %v1765 = vmul.f32 %v1592, %v1656
      %v1766 = vmul.f32 %v1592, %v1661
      %v1767 = vmul.f32 %v1592, %v1666
      %v1768 = vmul.f32 %v1592, %v1671
      %v1769 = vmul.f32 %v1592, %v1676
      %v1770 = vmul.f32 %v1592, %v1681
      %v1771 = vmul.f32 %v1592, %v1686
      %v1772 = vmul.f32 %v1592, %v1691
      %v1773 = vmul.f32 %v1592, %v1696
      %v1774 = vmul.f32 %v1592, %v1701
      %v1775 = vmul.f32 %v1592, %v1706
      %v1776 = vmul.f32 %v1592, %v1711
      %v1777 = vmul.f32 %v1592, %v1716
      %v1778 = vmul.f32 %v1592, %v1721
      %v1779 = vmul.f32 %v1592, %v1726
      %v1780 = vmul.f32 %v1592, %v1731
      %v1781 = vmul.f32 %v1592, %v1736
      %v1782 = vmul.f32 %v1592, %v1741
      %v1783 = vmul.f32 %v1592, %v1746
      %v1784 = vmul.f32 %v1592, %v1751
      %v1785 = vadd.f32 %v1560, %v1753
      %v1786 = vadd.f32 %v1561, %v1754
      %v1787 = vadd.f32 %v1562, %v1755
      %v1788 = vadd.f32 %v1563, %v1756
      %v1789 = vadd.f32 %v1564, %v1757
      %v1790 = vadd.f32 %v1565, %v1758
      %v1791 = vadd.f32 %v1566, %v1759
      %v1792 = vadd.f32 %v1567, %v1760
      %v1793 = vadd.f32 %v1568, %v1761
      %v1794 = vadd.f32 %v1569, %v1762
      %v1795 = vadd.f32 %v1570, %v1763
      %v1796 = vadd.f32 %v1571, %v1764
      %v1797 = vadd.f32 %v1572, %v1765
      %v1798 = vadd.f32 %v1573, %v1766
      %v1799 = vadd.f32 %v1574, %v1767
      %v1800 = vadd.f32 %v1575, %v1768
      %v1801 = vadd.f32 %v1576, %v1769
      %v1802 = vadd.f32 %v1577, %v1770
      %v1803 = vadd.f32 %v1578, %v1771
      %v1804 = vadd.f32 %v1579, %v1772
      %v1805 = vadd.f32 %v1580, %v1773
      %v1806 = vadd.f32 %v1581, %v1774
      %v1807 = vadd.f32 %v1582, %v1775
      %v1808 = vadd.f32 %v1583, %v1776
      %v1809 = vadd.f32 %v1584, %v1777
      %v1810 = vadd.f32 %v1585, %v1778
      %v1811 = vadd.f32 %v1586, %v1779
      %v1812 = vadd.f32 %v1587, %v1780
      %v1813 = vadd.f32 %v1588, %v1781
      %v1814 = vadd.f32 %v1589, %v1782
      %v1815 = vadd.f32 %v1590, %v1783
      %v1816 = vadd.f32 %v1591, %v1784
      %v1817 = vperm.slane %v1397, 3
      %1819 = vset.pattern.permute.xlu0 0
      %1820 = vperm.xlu0 %1819, %v1430
      %v1821 = vpop.permute.xlu0 %1820
      %1824 = vset.pattern.permute.xlu0 0
      %1825 = vperm.xlu0 %1824, %v1431
      %v1826 = vpop.permute.xlu0 %1825
      %1829 = vset.pattern.permute.xlu0 0
      %1830 = vperm.xlu0 %1829, %v1432
      %v1831 = vpop.permute.xlu0 %1830
      %1834 = vset.pattern.permute.xlu0 0
      %1835 = vperm.xlu0 %1834, %v1433
      %v1836 = vpop.permute.xlu0 %1835
      %1839 = vset.pattern.permute.xlu0 0
      %1840 = vperm.xlu0 %1839, %v1434
      %v1841 = vpop.permute.xlu0 %1840
      %1844 = vset.pattern.permute.xlu0 0
      %1845 = vperm.xlu0 %1844, %v1435
      %v1846 = vpop.permute.xlu0 %1845
      %1849 = vset.pattern.permute.xlu0 0
      %1850 = vperm.xlu0 %1849, %v1436
      %v1851 = vpop.permute.xlu0 %1850
      %1854 = vset.pattern.permute.xlu0 0
      %1855 = vperm.xlu0 %1854, %v1437
      %v1856 = vpop.permute.xlu0 %1855
      %1859 = vset.pattern.permute.xlu0 0
      %1860 = vperm.xlu0 %1859, %v1438
      %v1861 = vpop.permute.xlu0 %1860
      %1864 = vset.pattern.permute.xlu0 0
      %1865 = vperm.xlu0 %1864, %v1439
      %v1866 = vpop.permute.xlu0 %1865
      %1869 = vset.pattern.permute.xlu0 0
      %1870 = vperm.xlu0 %1869, %v1440
      %v1871 = vpop.permute.xlu0 %1870
      %1874 = vset.pattern.permute.xlu0 0
      %1875 = vperm.xlu0 %1874, %v1441
      %v1876 = vpop.permute.xlu0 %1875
      %1879 = vset.pattern.permute.xlu0 0
      %1880 = vperm.xlu0 %1879, %v1442
      %v1881 = vpop.permute.xlu0 %1880
      %1884 = vset.pattern.permute.xlu0 0
      %1885 = vperm.xlu0 %1884, %v1443
      %v1886 = vpop.permute.xlu0 %1885
      %1889 = vset.pattern.permute.xlu0 0
      %1890 = vperm.xlu0 %1889, %v1444
      %v1891 = vpop.permute.xlu0 %1890
      %1894 = vset.pattern.permute.xlu0 0
      %1895 = vperm.xlu0 %1894, %v1445
      %v1896 = vpop.permute.xlu0 %1895
      %1899 = vset.pattern.permute.xlu0 0
      %1900 = vperm.xlu0 %1899, %v1446
      %v1901 = vpop.permute.xlu0 %1900
      %1904 = vset.pattern.permute.xlu0 0
      %1905 = vperm.xlu0 %1904, %v1447
      %v1906 = vpop.permute.xlu0 %1905
      %1909 = vset.pattern.permute.xlu0 0
      %1910 = vperm.xlu0 %1909, %v1448
      %v1911 = vpop.permute.xlu0 %1910
      %1914 = vset.pattern.permute.xlu0 0
      %1915 = vperm.xlu0 %1914, %v1449
      %v1916 = vpop.permute.xlu0 %1915
      %1919 = vset.pattern.permute.xlu0 0
      %1920 = vperm.xlu0 %1919, %v1450
      %v1921 = vpop.permute.xlu0 %1920
      %1924 = vset.pattern.permute.xlu0 0
      %1925 = vperm.xlu0 %1924, %v1451
      %v1926 = vpop.permute.xlu0 %1925
      %1929 = vset.pattern.permute.xlu0 0
      %1930 = vperm.xlu0 %1929, %v1452
      %v1931 = vpop.permute.xlu0 %1930
      %1934 = vset.pattern.permute.xlu0 0
      %1935 = vperm.xlu0 %1934, %v1453
      %v1936 = vpop.permute.xlu0 %1935
      %1939 = vset.pattern.permute.xlu0 0
      %1940 = vperm.xlu0 %1939, %v1454
      %v1941 = vpop.permute.xlu0 %1940
      %1944 = vset.pattern.permute.xlu0 0
      %1945 = vperm.xlu0 %1944, %v1455
      %v1946 = vpop.permute.xlu0 %1945
      %1949 = vset.pattern.permute.xlu0 0
      %1950 = vperm.xlu0 %1949, %v1456
      %v1951 = vpop.permute.xlu0 %1950
      %1954 = vset.pattern.permute.xlu0 0
      %1955 = vperm.xlu0 %1954, %v1457
      %v1956 = vpop.permute.xlu0 %1955
      %1959 = vset.pattern.permute.xlu0 0
      %1960 = vperm.xlu0 %1959, %v1458
      %v1961 = vpop.permute.xlu0 %1960
      %1964 = vset.pattern.permute.xlu0 0
      %1965 = vperm.xlu0 %1964, %v1459
      %v1966 = vpop.permute.xlu0 %1965
      %1969 = vset.pattern.permute.xlu0 0
      %1970 = vperm.xlu0 %1969, %v1460
      %v1971 = vpop.permute.xlu0 %1970
      %1974 = vset.pattern.permute.xlu0 0
      %1975 = vperm.xlu0 %1974, %v1461
      %v1976 = vpop.permute.xlu0 %1975
      %v1978 = vmul.f32 %v1817, %v1821
      %v1979 = vmul.f32 %v1817, %v1826
      %v1980 = vmul.f32 %v1817, %v1831
      %v1981 = vmul.f32 %v1817, %v1836
      %v1982 = vmul.f32 %v1817, %v1841
      %v1983 = vmul.f32 %v1817, %v1846
      %v1984 = vmul.f32 %v1817, %v1851
      %v1985 = vmul.f32 %v1817, %v1856
      %v1986 = vmul.f32 %v1817, %v1861
      %v1987 = vmul.f32 %v1817, %v1866
      %v1988 = vmul.f32 %v1817, %v1871
      %v1989 = vmul.f32 %v1817, %v1876
      %v1990 = vmul.f32 %v1817, %v1881
      %v1991 = vmul.f32 %v1817, %v1886
      %v1992 = vmul.f32 %v1817, %v1891
      %v1993 = vmul.f32 %v1817, %v1896
      %v1994 = vmul.f32 %v1817, %v1901
      %v1995 = vmul.f32 %v1817, %v1906
      %v1996 = vmul.f32 %v1817, %v1911
      %v1997 = vmul.f32 %v1817, %v1916
      %v1998 = vmul.f32 %v1817, %v1921
      %v1999 = vmul.f32 %v1817, %v1926
      %v2000 = vmul.f32 %v1817, %v1931
      %v2001 = vmul.f32 %v1817, %v1936
      %v2002 = vmul.f32 %v1817, %v1941
      %v2003 = vmul.f32 %v1817, %v1946
      %v2004 = vmul.f32 %v1817, %v1951
      %v2005 = vmul.f32 %v1817, %v1956
      %v2006 = vmul.f32 %v1817, %v1961
      %v2007 = vmul.f32 %v1817, %v1966
      %v2008 = vmul.f32 %v1817, %v1971
      %v2009 = vmul.f32 %v1817, %v1976
      %v2010 = vadd.f32 %v1785, %v1978
      %v2011 = vadd.f32 %v1786, %v1979
      %v2012 = vadd.f32 %v1787, %v1980
      %v2013 = vadd.f32 %v1788, %v1981
      %v2014 = vadd.f32 %v1789, %v1982
      %v2015 = vadd.f32 %v1790, %v1983
      %v2016 = vadd.f32 %v1791, %v1984
      %v2017 = vadd.f32 %v1792, %v1985
      %v2018 = vadd.f32 %v1793, %v1986
      %v2019 = vadd.f32 %v1794, %v1987
      %v2020 = vadd.f32 %v1795, %v1988
      %v2021 = vadd.f32 %v1796, %v1989
      %v2022 = vadd.f32 %v1797, %v1990
      %v2023 = vadd.f32 %v1798, %v1991
      %v2024 = vadd.f32 %v1799, %v1992
      %v2025 = vadd.f32 %v1800, %v1993
      %v2026 = vadd.f32 %v1801, %v1994
      %v2027 = vadd.f32 %v1802, %v1995
      %v2028 = vadd.f32 %v1803, %v1996
      %v2029 = vadd.f32 %v1804, %v1997
      %v2030 = vadd.f32 %v1805, %v1998
      %v2031 = vadd.f32 %v1806, %v1999
      %v2032 = vadd.f32 %v1807, %v2000
      %v2033 = vadd.f32 %v1808, %v2001
      %v2034 = vadd.f32 %v1809, %v2002
      %v2035 = vadd.f32 %v1810, %v2003
      %v2036 = vadd.f32 %v1811, %v2004
      %v2037 = vadd.f32 %v1812, %v2005
      %v2038 = vadd.f32 %v1813, %v2006
      %v2039 = vadd.f32 %v1814, %v2007
      %v2040 = vadd.f32 %v1815, %v2008
      %v2041 = vadd.f32 %v1816, %v2009
      %v2042 = vperm.slane %v1397, 4
      %v2043 = vadd.f32 %v2010, %v2042
      %v2044 = vadd.f32 %v2011, %v2042
      %v2045 = vadd.f32 %v2012, %v2042
      %v2046 = vadd.f32 %v2013, %v2042
      %v2047 = vadd.f32 %v2014, %v2042
      %v2048 = vadd.f32 %v2015, %v2042
      %v2049 = vadd.f32 %v2016, %v2042
      %v2050 = vadd.f32 %v2017, %v2042
      %v2051 = vadd.f32 %v2018, %v2042
      %v2052 = vadd.f32 %v2019, %v2042
      %v2053 = vadd.f32 %v2020, %v2042
      %v2054 = vadd.f32 %v2021, %v2042
      %v2055 = vadd.f32 %v2022, %v2042
      %v2056 = vadd.f32 %v2023, %v2042
      %v2057 = vadd.f32 %v2024, %v2042
      %v2058 = vadd.f32 %v2025, %v2042
      %v2059 = vadd.f32 %v2026, %v2042
      %v2060 = vadd.f32 %v2027, %v2042
      %v2061 = vadd.f32 %v2028, %v2042
      %v2062 = vadd.f32 %v2029, %v2042
      %v2063 = vadd.f32 %v2030, %v2042
      %v2064 = vadd.f32 %v2031, %v2042
      %v2065 = vadd.f32 %v2032, %v2042
      %v2066 = vadd.f32 %v2033, %v2042
      %v2067 = vadd.f32 %v2034, %v2042
      %v2068 = vadd.f32 %v2035, %v2042
      %v2069 = vadd.f32 %v2036, %v2042
      %v2070 = vadd.f32 %v2037, %v2042
      %v2071 = vadd.f32 %v2038, %v2042
      %v2072 = vadd.f32 %v2039, %v2042
      %v2073 = vadd.f32 %v2040, %v2042
      %v2074 = vadd.f32 %v2041, %v2042
      %2075 = vst [vmem:[%s324] sm:$0xff] %v2043
      %2076 = vst [vmem:[%s324 + $0x8] sm:$0xff] %v2044
      %2077 = vst [vmem:[%s324 + $0x10] sm:$0xff] %v2045
      %2078 = vst [vmem:[%s324 + $0x18] sm:$0xff] %v2046
      %2079 = vst [vmem:[%s324 + $0x20] sm:$0xff] %v2047
      %2080 = vst [vmem:[%s324 + $0x28] sm:$0xff] %v2048
      %2081 = vst [vmem:[%s324 + $0x30] sm:$0xff] %v2049
      %2082 = vst [vmem:[%s324 + $0x38] sm:$0xff] %v2050
      %2083 = vst [vmem:[%s324 + $0x40] sm:$0xff] %v2051
      %2084 = vst [vmem:[%s324 + $0x48] sm:$0xff] %v2052
      %2085 = vst [vmem:[%s324 + $0x50] sm:$0xff] %v2053
      %2086 = vst [vmem:[%s324 + $0x58] sm:$0xff] %v2054
      %2087 = vst [vmem:[%s324 + $0x60] sm:$0xff] %v2055
      %2088 = vst [vmem:[%s324 + $0x68] sm:$0xff] %v2056
      %2089 = vst [vmem:[%s324 + $0x70] sm:$0xff] %v2057
      %2090 = vst [vmem:[%s324 + $0x78] sm:$0xff] %v2058
      %2091 = vst [vmem:[%s324 + $0x80] sm:$0xff] %v2059
      %2092 = vst [vmem:[%s324 + $0x88] sm:$0xff] %v2060
      %2093 = vst [vmem:[%s324 + $0x90] sm:$0xff] %v2061
      %2094 = vst [vmem:[%s324 + $0x98] sm:$0xff] %v2062
      %2095 = vst [vmem:[%s324 + $0xa0] sm:$0xff] %v2063
      %2096 = vst [vmem:[%s324 + $0xa8] sm:$0xff] %v2064
      %2097 = vst [vmem:[%s324 + $0xb0] sm:$0xff] %v2065
      %2098 = vst [vmem:[%s324 + $0xb8] sm:$0xff] %v2066
      %2099 = vst [vmem:[%s324 + $0xc0] sm:$0xff] %v2067
      %2100 = vst [vmem:[%s324 + $0xc8] sm:$0xff] %v2068
      %2101 = vst [vmem:[%s324 + $0xd0] sm:$0xff] %v2069
      %2102 = vst [vmem:[%s324 + $0xd8] sm:$0xff] %v2070
      %2103 = vst [vmem:[%s324 + $0xe0] sm:$0xff] %v2071
      %2104 = vst [vmem:[%s324 + $0xe8] sm:$0xff] %v2072
      %2105 = vst [vmem:[%s324 + $0xf0] sm:$0xff] %v2073
      %2106 = vst [vmem:[%s324 + $0xf8] sm:$0xff] %v2074
      %s2107 = smul.u32 32, %s18
      %p2108 = scmp.lt.s32.totalorder %s2107, 63
      %s2109 = scalar_select %p2108, %s2107, 63
      %s2110 = smul.addr %s2109, 8
      %s2111 = scalar_lea.vmem %s7, %s2110
      // Predicated region
      $region49: #{autoshape_forward.1} parent=47 // pred_check
        %p2112 = pneg %p198
      $region50: #{autoshape_forward.1} parent=47 // pred_check_branch
        %2114 = sbr.rel (%p2112) target = $region52
      $region51: #{autoshape_forward.1} parent=47 // pred_region
        %s2115 = smul.u32 32, %s18
      $region52: #{autoshape_forward.1} parent=47 // pred_fallthru
        _
    $region48: #{autoshape_forward.1} parent=5 // pred_fallthru
      _
    %p2116 = scmp.le.s32.totalorder 2, %s13
    // Predicated region
    $region53: #{autoshape_forward.1} parent=5 // pred_check
      %p2117 = pneg %p2116
    $region54: #{autoshape_forward.1} parent=5 // pred_check_branch
      %2119 = sbr.rel (%p2117) target = $region56
    $region55: #{autoshape_forward.1} parent=5 // pred_region
      %s2120 = ssub.s32 %s13, 2
      // Predicated region
      $region57: #{autoshape_forward.1} parent=55 // pred_check
        %p2121 = pneg %p204
      $region58: #{autoshape_forward.1} parent=55 // pred_check_branch
        %2123 = sbr.rel (%p2121) target = $region60
      $region59: #{autoshape_forward.1} parent=55 // pred_region
        %s2124 = smul.u32 32, %s19
        %p2125 = scmp.lt.s32.totalorder %s2124, 63
        %s2126 = scalar_select %p2125, %s2124, 63
        %s2127 = smul.addr %s2126, 8
        %s2128 = scalar_lea.vmem %s7, %s2127
      $region60: #{autoshape_forward.1} parent=55 // pred_fallthru
        _
    $region56: #{autoshape_forward.1} parent=5 // pred_fallthru
      _
  $region6: #{autoshape_forward.1} parent=0 // loop_footer
    %s17 = sadd.s32 1, %s13
  $region7: #{autoshape_forward.1} parent=0 // loop_footer_branch
    %12 = sbr.rel target = $region3
  $region8: #{autoshape_forward.1} parent=0 // loop_exit
    _

</llo_original>
